<compile_context>
chip_gen: v7x
topology: tpu7x:2x2x1
jax: 0.10.0
libtpu: 0.0.40
codegen_flags: <defaults>
</compile_context>

<pallas_src>
import functools

import jax
import jax.numpy as jnp
from jax.experimental import pallas as pl
from jax.experimental.pallas import tpu as pltpu  # noqa: F401  (kept for optional tuning)

MAX_LOGSTD = 2.0
MIN_LOGSTD = -10.0


def _softplus(x):
    # numerically stable softplus that lowers cleanly (exp/log on EUP)
    return jnp.maximum(x, 0.0) + jnp.log(1.0 + jnp.exp(-jnp.abs(x)))


# ---------------------------------------------------------------------------
# Single fused kernel: all ensemble members + member selection + variances.
# All operands are whole-array VMEM refs (no grid) -- total footprint < 200 KB.
# ---------------------------------------------------------------------------
def _fused_ensemble_kernel(xa_ref, xpad_ref, idx_ref,
                           w1_ref, b1_ref, wh_ref, bh_ref, noise_ref,
                           sel_ref, vdata_ref, vmax_ref):
    xa = xa_ref[...]                       # (B, D+A)
    x_pad = xpad_ref[...]                  # (B, D+1): x with a zero reward column
    idx = idx_ref[...]                     # (B, 1) int32 selected-member index per row
    nm = w1_ref.shape[0]
    od = x_pad.shape[-1]                   # D + 1

    obs_all = []                           # per-model packed [next_obs | reward], (B, od)
    sum_obs = jnp.zeros_like(x_pad)
    selected = jnp.zeros_like(x_pad)
    var_max = jnp.zeros((x_pad.shape[0], 1), jnp.float32)

    for m in range(nm):                    # nm is tiny & static -> unrolled at trace time
        # encoder: relu([x, a] @ W1 + b1)   (W1 pre-concatenated -> one MXU push)
        h = jnp.dot(xa, w1_ref[m], preferred_element_type=jnp.float32) + b1_ref[m]
        h = jnp.maximum(h, 0.0)
        # fused mu/logstd head: Whead = [Wmu | Wls]   (second and last MXU push)
        head = jnp.dot(h, wh_ref[m], preferred_element_type=jnp.float32) + bh_ref[m]
        mu = head[:, :od]
        logstd = head[:, od:]
        # soft clamp of logstd (same as d3rlpy ProbabilisticDynamicsModel)
        logstd = MAX_LOGSTD - _softplus(MAX_LOGSTD - logstd)
        logstd = MIN_LOGSTD + _softplus(logstd - MIN_LOGSTD)
        std = jnp.exp(logstd)

        pred = mu + std * noise_ref[m]     # rsample with externally supplied N(0,1) noise
        obs_full = x_pad + pred            # lanes [0:D] = next obs, lane D = reward

        obs_all.append(obs_full)
        sum_obs = sum_obs + obs_full
        # per-row member selection (replaces the external XLA gather)
        selected = jnp.where(idx == m, obs_full, selected)
        # variance_type='max': max over members of Normal(mu, std).variance.sum(1)
        var_max = jnp.maximum(var_max, jnp.sum(std * std, axis=1, keepdims=True))

    sel_ref[...] = selected                # packed [obs | reward] output slab

    # variance_type='data': unbiased (ddof=1) variance across members of
    # concat(obs, reward), summed over features.  Two-pass for robustness.
    mean_obs = sum_obs * (1.0 / nm)
    ssq = jnp.zeros_like(x_pad)
    for obs_full in obs_all:
        diff = obs_full - mean_obs
        ssq = ssq + diff * diff
    denom = 1.0 / (nm - 1) if nm > 1 else 0.0   # guard nm==1 (torch.std would give NaN)
    vdata_ref[...] = jnp.sum(ssq, axis=1, keepdims=True) * denom
    vmax_ref[...] = var_max


# ---------------------------------------------------------------------------
# EnsembleDynamics.forward
# ---------------------------------------------------------------------------
def ensemble_dynamics_forward(params, x, action, noise, indices,
                              with_variance=False, variance_type="data"):
    b, d = x.shape
    od = d + 1
    # cheap XLA-side preprocessing: one concat for the encoder input and a zero-padded x
    xa = jnp.concatenate([x, action], axis=1)                       # (B, D+A)
    x_pad = jnp.concatenate([x, jnp.zeros((b, 1), x.dtype)], axis=1)  # (B, D+1)
    idx = indices.astype(jnp.int32).reshape(b, 1)

    sel, var_data, var_max = pl.pallas_call(
        _fused_ensemble_kernel,
        out_shape=(
            jax.ShapeDtypeStruct((b, od), jnp.float32),   # packed [obs | reward]
            jax.ShapeDtypeStruct((b, 1), jnp.float32),    # 'data' ensemble variance
            jax.ShapeDtypeStruct((b, 1), jnp.float32),    # 'max' ensemble variance
        ),
    )(xa, x_pad, idx,
      params["w1"], params["b1"], params["whead"], params["bhead"], noise)

    observations = sel[:, :d]
    rewards = sel[:, d:]
    if with_variance:
        if variance_type == "data":
            return observations, rewards, var_data
        if variance_type == "max":
            return observations, rewards, var_max
        raise ValueError("invalid variance_type.")
    return observations, rewards


# ---------------------------------------------------------------------------
# Deterministic parameter construction (weights pre-concatenated for the kernel)
# ---------------------------------------------------------------------------
def make_params(key, n_models, obs_dim, act_dim, hidden):
    od = obs_dim + 1
    ks = jax.random.split(key, 6)

    def scaled(k, shape, fan_in):
        return (jax.random.normal(k, shape, jnp.float32) / jnp.sqrt(fan_in)).astype(jnp.float32)

    w1x = scaled(ks[0], (n_models, obs_dim, hidden), obs_dim + act_dim)
    w1a = scaled(ks[1], (n_models, act_dim, hidden), obs_dim + act_dim)
    b1 = jnp.zeros((n_models, 1, hidden), jnp.float32)
    wmu = scaled(ks[2], (n_models, hidden, od), hidden)
    bmu = 0.01 * jax.random.normal(ks[3], (n_models, 1, od), jnp.float32)
    wls = scaled(ks[4], (n_models, hidden, od), hidden)
    bls = 0.01 * jax.random.normal(ks[5], (n_models, 1, od), jnp.float32)

    # spectral_norm on the mu head: divide each model's weight by its top singular value
    sigma = jax.vmap(lambda w: jnp.linalg.svd(w, compute_uv=False)[0])(wmu)
    wmu = wmu / sigma[:, None, None]

    # pre-concatenate for the fused kernel: W1 = [W1x; W1a], Whead = [Wmu | Wls]
    w1 = jnp.concatenate([w1x, w1a], axis=1)        # (nm, D+A, H)
    whead = jnp.concatenate([wmu, wls], axis=2)     # (nm, H, 2*(D+1))
    bhead = jnp.concatenate([bmu, bls], axis=2)     # (nm, 1, 2*(D+1))
    return dict(w1=w1, b1=b1, whead=whead, bhead=bhead)


# ---------------------------------------------------------------------------
# Pure-JAX reference (correctness check only)
# ---------------------------------------------------------------------------
def reference_forward(params, x, action, noise, indices, with_variance, variance_type):
    nm = params["w1"].shape[0]
    b, d = x.shape
    od = d + 1
    xa = jnp.concatenate([x, action], axis=1)
    obs_l, rew_l, var_l = [], [], []
    for m in range(nm):
        h = jnp.maximum(xa @ params["w1"][m] + params["b1"][m][0], 0.0)
        head = h @ params["whead"][m] + params["bhead"][m][0]
        mu, ls = head[:, :od], head[:, od:]
        ls = MAX_LOGSTD - jax.nn.softplus(MAX_LOGSTD - ls)
        ls = MIN_LOGSTD + jax.nn.softplus(ls - MIN_LOGSTD)
        std = jnp.exp(ls)
        pred = mu + std * noise[m]
        obs_l.append(x + pred[:, :d])
        rew_l.append(pred[:, d:])
        var_l.append(jnp.sum(std ** 2, axis=1, keepdims=True))
    all_obs = jnp.stack(obs_l, axis=0)
    all_rew = jnp.stack(rew_l, axis=0)
    all_var = jnp.stack(var_l, axis=0)
    sel = jnp.arange(b)
    obs = all_obs[indices, sel]
    rew = all_rew[indices, sel]
    if not with_variance:
        return obs, rew
    if variance_type == "data":
        data = jnp.concatenate([all_obs, all_rew], axis=2)   # (nm, B, D+1)
        data = jnp.transpose(data, (1, 0, 2))                # (B, nm, D+1)
        var = jnp.sum(jnp.var(data, axis=1, ddof=1), axis=1, keepdims=True)
    else:
        var = jnp.max(jnp.transpose(all_var, (1, 0, 2)), axis=1)
    return obs, rew, var


if __name__ == "__main__":
    N_MODELS = 5
    B = 8
    OBS_DIM = 32
    ACT_DIM = 16
    HIDDEN = 64

    key = jax.random.PRNGKey(0)
    kp, kx, ka, kn, ki = jax.random.split(key, 5)

    params = make_params(kp, N_MODELS, OBS_DIM, ACT_DIM, HIDDEN)
    x = jax.random.normal(kx, (B, OBS_DIM), jnp.float32)
    action = jax.random.normal(ka, (B, ACT_DIM), jnp.float32)
    # reparameterization noise for each model's Normal(mu, std).rsample()
    noise = jax.random.normal(kn, (N_MODELS, B, OBS_DIM + 1), jnp.float32)
    # torch.randint(0, len(models), size=(B,)) equivalent, deterministic here
    indices = jax.random.randint(ki, (B,), 0, N_MODELS)

    fwd = jax.jit(functools.partial(
        ensemble_dynamics_forward, with_variance=True, variance_type="data"))
    obs, rew, var = fwd(params, x, action, noise, indices)
    jax.block_until_ready((obs, rew, var))

    assert obs.shape == (B, OBS_DIM) and rew.shape == (B, 1) and var.shape == (B, 1)

    r_obs, r_rew, r_var = reference_forward(
        params, x, action, noise, indices, True, "data")
    assert jnp.allclose(obs, r_obs, atol=1e-4, rtol=1e-4)
    assert jnp.allclose(rew, r_rew, atol=1e-4, rtol=1e-4)
    assert jnp.allclose(var, r_var, atol=1e-4, rtol=1e-4)

    # also exercise the with_variance=False path and 'max' variance type
    obs2, rew2 = ensemble_dynamics_forward(params, x, action, noise, indices)
    obs3, rew3, var3 = ensemble_dynamics_forward(
        params, x, action, noise, indices, with_variance=True, variance_type="max")
    jax.block_until_ready((obs2, rew2, var3))
    _, _, r_var_max = reference_forward(params, x, action, noise, indices, True, "max")
    assert jnp.allclose(obs2, r_obs, atol=1e-4, rtol=1e-4)
    assert jnp.allclose(var3, r_var_max, atol=1e-4, rtol=1e-4)

    print("KERNEL_OK")
</pallas_src>

<mosaic_0001>
module attributes {stable_mosaic.version = 11 : i64} {
  func.func @_fused_ensemble_kernel(%arg0: memref<8x48xf32, #tpu.memory_space<vmem>>, %arg1: memref<8x33xf32, #tpu.memory_space<vmem>>, %arg2: memref<8x1xi32, #tpu.memory_space<vmem>>, %arg3: memref<5x48x64xf32, #tpu.memory_space<vmem>>, %arg4: memref<5x1x64xf32, #tpu.memory_space<vmem>>, %arg5: memref<5x64x66xf32, #tpu.memory_space<vmem>>, %arg6: memref<5x1x66xf32, #tpu.memory_space<vmem>>, %arg7: memref<5x8x33xf32, #tpu.memory_space<vmem>>, %arg8: memref<8x33xf32, #tpu.memory_space<vmem>>, %arg9: memref<8x1xf32, #tpu.memory_space<vmem>>, %arg10: memref<8x1xf32, #tpu.memory_space<vmem>>) attributes {dimension_semantics = [], scalar_prefetch = 0 : i64, scratch_operands = 0 : i64, tpu.core_type = #tpu.core_type<tc>} {
    %c0 = arith.constant 0 : index
    %c0_0 = arith.constant 0 : index
    %0 = vector.load %arg0[%c0, %c0_0] : memref<8x48xf32, #tpu.memory_space<vmem>>, vector<8x48xf32>
    %c0_1 = arith.constant 0 : index
    %c0_2 = arith.constant 0 : index
    %1 = vector.load %arg1[%c0_1, %c0_2] : memref<8x33xf32, #tpu.memory_space<vmem>>, vector<8x33xf32>
    %c0_3 = arith.constant 0 : index
    %c0_4 = arith.constant 0 : index
    %2 = vector.load %arg2[%c0_3, %c0_4] : memref<8x1xi32, #tpu.memory_space<vmem>>, vector<8x1xi32>
    %cst = arith.constant 0.000000e+00 : f32
    %3 = vector.broadcast %cst : f32 to vector<8x33xf32>
    %cst_5 = arith.constant 0.000000e+00 : f32
    %4 = vector.broadcast %cst_5 : f32 to vector<8x33xf32>
    %cst_6 = arith.constant 0.000000e+00 : f32
    %5 = vector.broadcast %cst_6 : f32 to vector<8x1xf32>
    %c0_7 = arith.constant 0 : index
    %c0_8 = arith.constant 0 : index
    %c0_9 = arith.constant 0 : index
    %6 = vector.load %arg3[%c0_7, %c0_8, %c0_9] : memref<5x48x64xf32, #tpu.memory_space<vmem>>, vector<1x48x64xf32>
    %7 = vector.shape_cast %6 : vector<1x48x64xf32> to vector<48x64xf32>
    %cst_10 = arith.constant dense<0.000000e+00> : vector<8x64xf32>
    %8 = tpu.matmul %0, %7, %cst_10 {dimension_numbers = #tpu.dot_dimension_numbers<[1], [0], [0], [1], [0, 0, 1, 1], [], []>} : vector<8x48xf32>, vector<48x64xf32>, vector<8x64xf32> -> vector<8x64xf32>
    %c0_11 = arith.constant 0 : index
    %c0_12 = arith.constant 0 : index
    %c0_13 = arith.constant 0 : index
    %9 = vector.load %arg4[%c0_11, %c0_12, %c0_13] : memref<5x1x64xf32, #tpu.memory_space<vmem>>, vector<1x1x64xf32>
    %10 = vector.shape_cast %9 : vector<1x1x64xf32> to vector<1x64xf32>
    %11 = vector.broadcast %10 : vector<1x64xf32> to vector<8x64xf32>
    %12 = arith.addf %8, %11 : vector<8x64xf32>
    %cst_14 = arith.constant 0.000000e+00 : f32
    %13 = vector.broadcast %cst_14 : f32 to vector<8x64xf32>
    %14 = arith.maximumf %12, %13 : vector<8x64xf32>
    %c0_15 = arith.constant 0 : index
    %c0_16 = arith.constant 0 : index
    %c0_17 = arith.constant 0 : index
    %15 = vector.load %arg5[%c0_15, %c0_16, %c0_17] : memref<5x64x66xf32, #tpu.memory_space<vmem>>, vector<1x64x66xf32>
    %16 = vector.shape_cast %15 : vector<1x64x66xf32> to vector<64x66xf32>
    %cst_18 = arith.constant dense<0.000000e+00> : vector<8x66xf32>
    %17 = tpu.matmul %14, %16, %cst_18 {dimension_numbers = #tpu.dot_dimension_numbers<[1], [0], [0], [1], [0, 0, 1, 1], [], []>} : vector<8x64xf32>, vector<64x66xf32>, vector<8x66xf32> -> vector<8x66xf32>
    %c0_19 = arith.constant 0 : index
    %c0_20 = arith.constant 0 : index
    %c0_21 = arith.constant 0 : index
    %18 = vector.load %arg6[%c0_19, %c0_20, %c0_21] : memref<5x1x66xf32, #tpu.memory_space<vmem>>, vector<1x1x66xf32>
    %19 = vector.shape_cast %18 : vector<1x1x66xf32> to vector<1x66xf32>
    %20 = vector.broadcast %19 : vector<1x66xf32> to vector<8x66xf32>
    %21 = arith.addf %17, %20 : vector<8x66xf32>
    %22 = vector.extract_strided_slice %21 {offsets = [0, 0], sizes = [8, 33], strides = [1, 1]} : vector<8x66xf32> to vector<8x33xf32>
    %23 = vector.extract_strided_slice %21 {offsets = [0, 33], sizes = [8, 33], strides = [1, 1]} : vector<8x66xf32> to vector<8x33xf32>
    %cst_22 = arith.constant 2.000000e+00 : f32
    %24 = vector.broadcast %cst_22 : f32 to vector<8x33xf32>
    %25 = arith.subf %24, %23 : vector<8x33xf32>
    %cst_23 = arith.constant 0.000000e+00 : f32
    %26 = vector.broadcast %cst_23 : f32 to vector<8x33xf32>
    %27 = arith.maximumf %25, %26 : vector<8x33xf32>
    %28 = math.absf %25 : vector<8x33xf32>
    %cst_24 = arith.constant 0.000000e+00 : f32
    %29 = vector.broadcast %cst_24 : f32 to vector<8x33xf32>
    %30 = arith.subf %29, %28 : vector<8x33xf32>
    %31 = math.exp %30 : vector<8x33xf32>
    %cst_25 = arith.constant 1.000000e+00 : f32
    %32 = vector.broadcast %cst_25 : f32 to vector<8x33xf32>
    %33 = arith.addf %32, %31 : vector<8x33xf32>
    %34 = math.log %33 : vector<8x33xf32>
    %35 = arith.addf %27, %34 : vector<8x33xf32>
    %cst_26 = arith.constant 2.000000e+00 : f32
    %36 = vector.broadcast %cst_26 : f32 to vector<8x33xf32>
    %37 = arith.subf %36, %35 : vector<8x33xf32>
    %cst_27 = arith.constant -1.000000e+01 : f32
    %38 = vector.broadcast %cst_27 : f32 to vector<8x33xf32>
    %39 = arith.subf %37, %38 : vector<8x33xf32>
    %cst_28 = arith.constant 0.000000e+00 : f32
    %40 = vector.broadcast %cst_28 : f32 to vector<8x33xf32>
    %41 = arith.maximumf %39, %40 : vector<8x33xf32>
    %42 = math.absf %39 : vector<8x33xf32>
    %cst_29 = arith.constant 0.000000e+00 : f32
    %43 = vector.broadcast %cst_29 : f32 to vector<8x33xf32>
    %44 = arith.subf %43, %42 : vector<8x33xf32>
    %45 = math.exp %44 : vector<8x33xf32>
    %cst_30 = arith.constant 1.000000e+00 : f32
    %46 = vector.broadcast %cst_30 : f32 to vector<8x33xf32>
    %47 = arith.addf %46, %45 : vector<8x33xf32>
    %48 = math.log %47 : vector<8x33xf32>
    %49 = arith.addf %41, %48 : vector<8x33xf32>
    %cst_31 = arith.constant -1.000000e+01 : f32
    %50 = vector.broadcast %cst_31 : f32 to vector<8x33xf32>
    %51 = arith.addf %50, %49 : vector<8x33xf32>
    %52 = math.exp %51 : vector<8x33xf32>
    %c0_32 = arith.constant 0 : index
    %c0_33 = arith.constant 0 : index
    %c0_34 = arith.constant 0 : index
    %53 = vector.load %arg7[%c0_32, %c0_33, %c0_34] : memref<5x8x33xf32, #tpu.memory_space<vmem>>, vector<1x8x33xf32>
    %54 = vector.shape_cast %53 : vector<1x8x33xf32> to vector<8x33xf32>
    %55 = arith.mulf %52, %54 : vector<8x33xf32>
    %56 = arith.addf %22, %55 : vector<8x33xf32>
    %57 = arith.addf %1, %56 : vector<8x33xf32>
    %58 = arith.addf %3, %57 : vector<8x33xf32>
    %c0_i32 = arith.constant 0 : i32
    %59 = vector.broadcast %c0_i32 : i32 to vector<8x1xi32>
    %60 = arith.cmpi eq, %2, %59 : vector<8x1xi32>
    %61 = vector.shape_cast %60 : vector<8x1xi1> to vector<8x1xi1>
    %62 = vector.broadcast %61 : vector<8x1xi1> to vector<8x33xi1>
    %63 = arith.select %62, %57, %4 : vector<8x33xi1>, vector<8x33xf32>
    %64 = arith.mulf %52, %52 : vector<8x33xf32>
    %cst_35 = arith.constant dense<0.000000e+00> : vector<8xf32>
    %65 = vector.multi_reduction <add>, %64, %cst_35 [1] : vector<8x33xf32> to vector<8xf32>
    %66 = vector.shape_cast %65 : vector<8xf32> to vector<8x1xf32>
    %67 = arith.maximumf %5, %66 : vector<8x1xf32>
    %c1 = arith.constant 1 : index
    %c0_36 = arith.constant 0 : index
    %c0_37 = arith.constant 0 : index
    %68 = vector.load %arg3[%c1, %c0_36, %c0_37] : memref<5x48x64xf32, #tpu.memory_space<vmem>>, vector<1x48x64xf32>
    %69 = vector.shape_cast %68 : vector<1x48x64xf32> to vector<48x64xf32>
    %cst_38 = arith.constant dense<0.000000e+00> : vector<8x64xf32>
    %70 = tpu.matmul %0, %69, %cst_38 {dimension_numbers = #tpu.dot_dimension_numbers<[1], [0], [0], [1], [0, 0, 1, 1], [], []>} : vector<8x48xf32>, vector<48x64xf32>, vector<8x64xf32> -> vector<8x64xf32>
    %c1_39 = arith.constant 1 : index
    %c0_40 = arith.constant 0 : index
    %c0_41 = arith.constant 0 : index
    %71 = vector.load %arg4[%c1_39, %c0_40, %c0_41] : memref<5x1x64xf32, #tpu.memory_space<vmem>>, vector<1x1x64xf32>
    %72 = vector.shape_cast %71 : vector<1x1x64xf32> to vector<1x64xf32>
    %73 = vector.broadcast %72 : vector<1x64xf32> to vector<8x64xf32>
    %74 = arith.addf %70, %73 : vector<8x64xf32>
    %cst_42 = arith.constant 0.000000e+00 : f32
    %75 = vector.broadcast %cst_42 : f32 to vector<8x64xf32>
    %76 = arith.maximumf %74, %75 : vector<8x64xf32>
    %c1_43 = arith.constant 1 : index
    %c0_44 = arith.constant 0 : index
    %c0_45 = arith.constant 0 : index
    %77 = vector.load %arg5[%c1_43, %c0_44, %c0_45] : memref<5x64x66xf32, #tpu.memory_space<vmem>>, vector<1x64x66xf32>
    %78 = vector.shape_cast %77 : vector<1x64x66xf32> to vector<64x66xf32>
    %cst_46 = arith.constant dense<0.000000e+00> : vector<8x66xf32>
    %79 = tpu.matmul %76, %78, %cst_46 {dimension_numbers = #tpu.dot_dimension_numbers<[1], [0], [0], [1], [0, 0, 1, 1], [], []>} : vector<8x64xf32>, vector<64x66xf32>, vector<8x66xf32> -> vector<8x66xf32>
    %c1_47 = arith.constant 1 : index
    %c0_48 = arith.constant 0 : index
    %c0_49 = arith.constant 0 : index
    %80 = vector.load %arg6[%c1_47, %c0_48, %c0_49] : memref<5x1x66xf32, #tpu.memory_space<vmem>>, vector<1x1x66xf32>
    %81 = vector.shape_cast %80 : vector<1x1x66xf32> to vector<1x66xf32>
    %82 = vector.broadcast %81 : vector<1x66xf32> to vector<8x66xf32>
    %83 = arith.addf %79, %82 : vector<8x66xf32>
    %84 = vector.extract_strided_slice %83 {offsets = [0, 0], sizes = [8, 33], strides = [1, 1]} : vector<8x66xf32> to vector<8x33xf32>
    %85 = vector.extract_strided_slice %83 {offsets = [0, 33], sizes = [8, 33], strides = [1, 1]} : vector<8x66xf32> to vector<8x33xf32>
    %cst_50 = arith.constant 2.000000e+00 : f32
    %86 = vector.broadcast %cst_50 : f32 to vector<8x33xf32>
    %87 = arith.subf %86, %85 : vector<8x33xf32>
    %cst_51 = arith.constant 0.000000e+00 : f32
    %88 = vector.broadcast %cst_51 : f32 to vector<8x33xf32>
    %89 = arith.maximumf %87, %88 : vector<8x33xf32>
    %90 = math.absf %87 : vector<8x33xf32>
    %cst_52 = arith.constant 0.000000e+00 : f32
    %91 = vector.broadcast %cst_52 : f32 to vector<8x33xf32>
    %92 = arith.subf %91, %90 : vector<8x33xf32>
    %93 = math.exp %92 : vector<8x33xf32>
    %cst_53 = arith.constant 1.000000e+00 : f32
    %94 = vector.broadcast %cst_53 : f32 to vector<8x33xf32>
    %95 = arith.addf %94, %93 : vector<8x33xf32>
    %96 = math.log %95 : vector<8x33xf32>
    %97 = arith.addf %89, %96 : vector<8x33xf32>
    %cst_54 = arith.constant 2.000000e+00 : f32
    %98 = vector.broadcast %cst_54 : f32 to vector<8x33xf32>
    %99 = arith.subf %98, %97 : vector<8x33xf32>
    %cst_55 = arith.constant -1.000000e+01 : f32
    %100 = vector.broadcast %cst_55 : f32 to vector<8x33xf32>
    %101 = arith.subf %99, %100 : vector<8x33xf32>
    %cst_56 = arith.constant 0.000000e+00 : f32
    %102 = vector.broadcast %cst_56 : f32 to vector<8x33xf32>
    %103 = arith.maximumf %101, %102 : vector<8x33xf32>
    %104 = math.absf %101 : vector<8x33xf32>
    %cst_57 = arith.constant 0.000000e+00 : f32
    %105 = vector.broadcast %cst_57 : f32 to vector<8x33xf32>
    %106 = arith.subf %105, %104 : vector<8x33xf32>
    %107 = math.exp %106 : vector<8x33xf32>
    %cst_58 = arith.constant 1.000000e+00 : f32
    %108 = vector.broadcast %cst_58 : f32 to vector<8x33xf32>
    %109 = arith.addf %108, %107 : vector<8x33xf32>
    %110 = math.log %109 : vector<8x33xf32>
    %111 = arith.addf %103, %110 : vector<8x33xf32>
    %cst_59 = arith.constant -1.000000e+01 : f32
    %112 = vector.broadcast %cst_59 : f32 to vector<8x33xf32>
    %113 = arith.addf %112, %111 : vector<8x33xf32>
    %114 = math.exp %113 : vector<8x33xf32>
    %c1_60 = arith.constant 1 : index
    %c0_61 = arith.constant 0 : index
    %c0_62 = arith.constant 0 : index
    %115 = vector.load %arg7[%c1_60, %c0_61, %c0_62] : memref<5x8x33xf32, #tpu.memory_space<vmem>>, vector<1x8x33xf32>
    %116 = vector.shape_cast %115 : vector<1x8x33xf32> to vector<8x33xf32>
    %117 = arith.mulf %114, %116 : vector<8x33xf32>
    %118 = arith.addf %84, %117 : vector<8x33xf32>
    %119 = arith.addf %1, %118 : vector<8x33xf32>
    %120 = arith.addf %58, %119 : vector<8x33xf32>
    %c1_i32 = arith.constant 1 : i32
    %121 = vector.broadcast %c1_i32 : i32 to vector<8x1xi32>
    %122 = arith.cmpi eq, %2, %121 : vector<8x1xi32>
    %123 = vector.shape_cast %122 : vector<8x1xi1> to vector<8x1xi1>
    %124 = vector.broadcast %123 : vector<8x1xi1> to vector<8x33xi1>
    %125 = arith.select %124, %119, %63 : vector<8x33xi1>, vector<8x33xf32>
    %126 = arith.mulf %114, %114 : vector<8x33xf32>
    %cst_63 = arith.constant dense<0.000000e+00> : vector<8xf32>
    %127 = vector.multi_reduction <add>, %126, %cst_63 [1] : vector<8x33xf32> to vector<8xf32>
    %128 = vector.shape_cast %127 : vector<8xf32> to vector<8x1xf32>
    %129 = arith.maximumf %67, %128 : vector<8x1xf32>
    %c2 = arith.constant 2 : index
    %c0_64 = arith.constant 0 : index
    %c0_65 = arith.constant 0 : index
    %130 = vector.load %arg3[%c2, %c0_64, %c0_65] : memref<5x48x64xf32, #tpu.memory_space<vmem>>, vector<1x48x64xf32>
    %131 = vector.shape_cast %130 : vector<1x48x64xf32> to vector<48x64xf32>
    %cst_66 = arith.constant dense<0.000000e+00> : vector<8x64xf32>
    %132 = tpu.matmul %0, %131, %cst_66 {dimension_numbers = #tpu.dot_dimension_numbers<[1], [0], [0], [1], [0, 0, 1, 1], [], []>} : vector<8x48xf32>, vector<48x64xf32>, vector<8x64xf32> -> vector<8x64xf32>
    %c2_67 = arith.constant 2 : index
    %c0_68 = arith.constant 0 : index
    %c0_69 = arith.constant 0 : index
    %133 = vector.load %arg4[%c2_67, %c0_68, %c0_69] : memref<5x1x64xf32, #tpu.memory_space<vmem>>, vector<1x1x64xf32>
    %134 = vector.shape_cast %133 : vector<1x1x64xf32> to vector<1x64xf32>
    %135 = vector.broadcast %134 : vector<1x64xf32> to vector<8x64xf32>
    %136 = arith.addf %132, %135 : vector<8x64xf32>
    %cst_70 = arith.constant 0.000000e+00 : f32
    %137 = vector.broadcast %cst_70 : f32 to vector<8x64xf32>
    %138 = arith.maximumf %136, %137 : vector<8x64xf32>
    %c2_71 = arith.constant 2 : index
    %c0_72 = arith.constant 0 : index
    %c0_73 = arith.constant 0 : index
    %139 = vector.load %arg5[%c2_71, %c0_72, %c0_73] : memref<5x64x66xf32, #tpu.memory_space<vmem>>, vector<1x64x66xf32>
    %140 = vector.shape_cast %139 : vector<1x64x66xf32> to vector<64x66xf32>
    %cst_74 = arith.constant dense<0.000000e+00> : vector<8x66xf32>
    %141 = tpu.matmul %138, %140, %cst_74 {dimension_numbers = #tpu.dot_dimension_numbers<[1], [0], [0], [1], [0, 0, 1, 1], [], []>} : vector<8x64xf32>, vector<64x66xf32>, vector<8x66xf32> -> vector<8x66xf32>
    %c2_75 = arith.constant 2 : index
    %c0_76 = arith.constant 0 : index
    %c0_77 = arith.constant 0 : index
    %142 = vector.load %arg6[%c2_75, %c0_76, %c0_77] : memref<5x1x66xf32, #tpu.memory_space<vmem>>, vector<1x1x66xf32>
    %143 = vector.shape_cast %142 : vector<1x1x66xf32> to vector<1x66xf32>
    %144 = vector.broadcast %143 : vector<1x66xf32> to vector<8x66xf32>
    %145 = arith.addf %141, %144 : vector<8x66xf32>
    %146 = vector.extract_strided_slice %145 {offsets = [0, 0], sizes = [8, 33], strides = [1, 1]} : vector<8x66xf32> to vector<8x33xf32>
    %147 = vector.extract_strided_slice %145 {offsets = [0, 33], sizes = [8, 33], strides = [1, 1]} : vector<8x66xf32> to vector<8x33xf32>
    %cst_78 = arith.constant 2.000000e+00 : f32
    %148 = vector.broadcast %cst_78 : f32 to vector<8x33xf32>
    %149 = arith.subf %148, %147 : vector<8x33xf32>
    %cst_79 = arith.constant 0.000000e+00 : f32
    %150 = vector.broadcast %cst_79 : f32 to vector<8x33xf32>
    %151 = arith.maximumf %149, %150 : vector<8x33xf32>
    %152 = math.absf %149 : vector<8x33xf32>
    %cst_80 = arith.constant 0.000000e+00 : f32
    %153 = vector.broadcast %cst_80 : f32 to vector<8x33xf32>
    %154 = arith.subf %153, %152 : vector<8x33xf32>
    %155 = math.exp %154 : vector<8x33xf32>
    %cst_81 = arith.constant 1.000000e+00 : f32
    %156 = vector.broadcast %cst_81 : f32 to vector<8x33xf32>
    %157 = arith.addf %156, %155 : vector<8x33xf32>
    %158 = math.log %157 : vector<8x33xf32>
    %159 = arith.addf %151, %158 : vector<8x33xf32>
    %cst_82 = arith.constant 2.000000e+00 : f32
    %160 = vector.broadcast %cst_82 : f32 to vector<8x33xf32>
    %161 = arith.subf %160, %159 : vector<8x33xf32>
    %cst_83 = arith.constant -1.000000e+01 : f32
    %162 = vector.broadcast %cst_83 : f32 to vector<8x33xf32>
    %163 = arith.subf %161, %162 : vector<8x33xf32>
    %cst_84 = arith.constant 0.000000e+00 : f32
    %164 = vector.broadcast %cst_84 : f32 to vector<8x33xf32>
    %165 = arith.maximumf %163, %164 : vector<8x33xf32>
    %166 = math.absf %163 : vector<8x33xf32>
    %cst_85 = arith.constant 0.000000e+00 : f32
    %167 = vector.broadcast %cst_85 : f32 to vector<8x33xf32>
    %168 = arith.subf %167, %166 : vector<8x33xf32>
    %169 = math.exp %168 : vector<8x33xf32>
    %cst_86 = arith.constant 1.000000e+00 : f32
    %170 = vector.broadcast %cst_86 : f32 to vector<8x33xf32>
    %171 = arith.addf %170, %169 : vector<8x33xf32>
    %172 = math.log %171 : vector<8x33xf32>
    %173 = arith.addf %165, %172 : vector<8x33xf32>
    %cst_87 = arith.constant -1.000000e+01 : f32
    %174 = vector.broadcast %cst_87 : f32 to vector<8x33xf32>
    %175 = arith.addf %174, %173 : vector<8x33xf32>
    %176 = math.exp %175 : vector<8x33xf32>
    %c2_88 = arith.constant 2 : index
    %c0_89 = arith.constant 0 : index
    %c0_90 = arith.constant 0 : index
    %177 = vector.load %arg7[%c2_88, %c0_89, %c0_90] : memref<5x8x33xf32, #tpu.memory_space<vmem>>, vector<1x8x33xf32>
    %178 = vector.shape_cast %177 : vector<1x8x33xf32> to vector<8x33xf32>
    %179 = arith.mulf %176, %178 : vector<8x33xf32>
    %180 = arith.addf %146, %179 : vector<8x33xf32>
    %181 = arith.addf %1, %180 : vector<8x33xf32>
    %182 = arith.addf %120, %181 : vector<8x33xf32>
    %c2_i32 = arith.constant 2 : i32
    %183 = vector.broadcast %c2_i32 : i32 to vector<8x1xi32>
    %184 = arith.cmpi eq, %2, %183 : vector<8x1xi32>
    %185 = vector.shape_cast %184 : vector<8x1xi1> to vector<8x1xi1>
    %186 = vector.broadcast %185 : vector<8x1xi1> to vector<8x33xi1>
    %187 = arith.select %186, %181, %125 : vector<8x33xi1>, vector<8x33xf32>
    %188 = arith.mulf %176, %176 : vector<8x33xf32>
    %cst_91 = arith.constant dense<0.000000e+00> : vector<8xf32>
    %189 = vector.multi_reduction <add>, %188, %cst_91 [1] : vector<8x33xf32> to vector<8xf32>
    %190 = vector.shape_cast %189 : vector<8xf32> to vector<8x1xf32>
    %191 = arith.maximumf %129, %190 : vector<8x1xf32>
    %c3 = arith.constant 3 : index
    %c0_92 = arith.constant 0 : index
    %c0_93 = arith.constant 0 : index
    %192 = vector.load %arg3[%c3, %c0_92, %c0_93] : memref<5x48x64xf32, #tpu.memory_space<vmem>>, vector<1x48x64xf32>
    %193 = vector.shape_cast %192 : vector<1x48x64xf32> to vector<48x64xf32>
    %cst_94 = arith.constant dense<0.000000e+00> : vector<8x64xf32>
    %194 = tpu.matmul %0, %193, %cst_94 {dimension_numbers = #tpu.dot_dimension_numbers<[1], [0], [0], [1], [0, 0, 1, 1], [], []>} : vector<8x48xf32>, vector<48x64xf32>, vector<8x64xf32> -> vector<8x64xf32>
    %c3_95 = arith.constant 3 : index
    %c0_96 = arith.constant 0 : index
    %c0_97 = arith.constant 0 : index
    %195 = vector.load %arg4[%c3_95, %c0_96, %c0_97] : memref<5x1x64xf32, #tpu.memory_space<vmem>>, vector<1x1x64xf32>
    %196 = vector.shape_cast %195 : vector<1x1x64xf32> to vector<1x64xf32>
    %197 = vector.broadcast %196 : vector<1x64xf32> to vector<8x64xf32>
    %198 = arith.addf %194, %197 : vector<8x64xf32>
    %cst_98 = arith.constant 0.000000e+00 : f32
    %199 = vector.broadcast %cst_98 : f32 to vector<8x64xf32>
    %200 = arith.maximumf %198, %199 : vector<8x64xf32>
    %c3_99 = arith.constant 3 : index
    %c0_100 = arith.constant 0 : index
    %c0_101 = arith.constant 0 : index
    %201 = vector.load %arg5[%c3_99, %c0_100, %c0_101] : memref<5x64x66xf32, #tpu.memory_space<vmem>>, vector<1x64x66xf32>
    %202 = vector.shape_cast %201 : vector<1x64x66xf32> to vector<64x66xf32>
    %cst_102 = arith.constant dense<0.000000e+00> : vector<8x66xf32>
    %203 = tpu.matmul %200, %202, %cst_102 {dimension_numbers = #tpu.dot_dimension_numbers<[1], [0], [0], [1], [0, 0, 1, 1], [], []>} : vector<8x64xf32>, vector<64x66xf32>, vector<8x66xf32> -> vector<8x66xf32>
    %c3_103 = arith.constant 3 : index
    %c0_104 = arith.constant 0 : index
    %c0_105 = arith.constant 0 : index
    %204 = vector.load %arg6[%c3_103, %c0_104, %c0_105] : memref<5x1x66xf32, #tpu.memory_space<vmem>>, vector<1x1x66xf32>
    %205 = vector.shape_cast %204 : vector<1x1x66xf32> to vector<1x66xf32>
    %206 = vector.broadcast %205 : vector<1x66xf32> to vector<8x66xf32>
    %207 = arith.addf %203, %206 : vector<8x66xf32>
    %208 = vector.extract_strided_slice %207 {offsets = [0, 0], sizes = [8, 33], strides = [1, 1]} : vector<8x66xf32> to vector<8x33xf32>
    %209 = vector.extract_strided_slice %207 {offsets = [0, 33], sizes = [8, 33], strides = [1, 1]} : vector<8x66xf32> to vector<8x33xf32>
    %cst_106 = arith.constant 2.000000e+00 : f32
    %210 = vector.broadcast %cst_106 : f32 to vector<8x33xf32>
    %211 = arith.subf %210, %209 : vector<8x33xf32>
    %cst_107 = arith.constant 0.000000e+00 : f32
    %212 = vector.broadcast %cst_107 : f32 to vector<8x33xf32>
    %213 = arith.maximumf %211, %212 : vector<8x33xf32>
    %214 = math.absf %211 : vector<8x33xf32>
    %cst_108 = arith.constant 0.000000e+00 : f32
    %215 = vector.broadcast %cst_108 : f32 to vector<8x33xf32>
    %216 = arith.subf %215, %214 : vector<8x33xf32>
    %217 = math.exp %216 : vector<8x33xf32>
    %cst_109 = arith.constant 1.000000e+00 : f32
    %218 = vector.broadcast %cst_109 : f32 to vector<8x33xf32>
    %219 = arith.addf %218, %217 : vector<8x33xf32>
    %220 = math.log %219 : vector<8x33xf32>
    %221 = arith.addf %213, %220 : vector<8x33xf32>
    %cst_110 = arith.constant 2.000000e+00 : f32
    %222 = vector.broadcast %cst_110 : f32 to vector<8x33xf32>
    %223 = arith.subf %222, %221 : vector<8x33xf32>
    %cst_111 = arith.constant -1.000000e+01 : f32
    %224 = vector.broadcast %cst_111 : f32 to vector<8x33xf32>
    %225 = arith.subf %223, %224 : vector<8x33xf32>
    %cst_112 = arith.constant 0.000000e+00 : f32
    %226 = vector.broadcast %cst_112 : f32 to vector<8x33xf32>
    %227 = arith.maximumf %225, %226 : vector<8x33xf32>
    %228 = math.absf %225 : vector<8x33xf32>
    %cst_113 = arith.constant 0.000000e+00 : f32
    %229 = vector.broadcast %cst_113 : f32 to vector<8x33xf32>
    %230 = arith.subf %229, %228 : vector<8x33xf32>
    %231 = math.exp %230 : vector<8x33xf32>
    %cst_114 = arith.constant 1.000000e+00 : f32
    %232 = vector.broadcast %cst_114 : f32 to vector<8x33xf32>
    %233 = arith.addf %232, %231 : vector<8x33xf32>
    %234 = math.log %233 : vector<8x33xf32>
    %235 = arith.addf %227, %234 : vector<8x33xf32>
    %cst_115 = arith.constant -1.000000e+01 : f32
    %236 = vector.broadcast %cst_115 : f32 to vector<8x33xf32>
    %237 = arith.addf %236, %235 : vector<8x33xf32>
    %238 = math.exp %237 : vector<8x33xf32>
    %c3_116 = arith.constant 3 : index
    %c0_117 = arith.constant 0 : index
    %c0_118 = arith.constant 0 : index
    %239 = vector.load %arg7[%c3_116, %c0_117, %c0_118] : memref<5x8x33xf32, #tpu.memory_space<vmem>>, vector<1x8x33xf32>
    %240 = vector.shape_cast %239 : vector<1x8x33xf32> to vector<8x33xf32>
    %241 = arith.mulf %238, %240 : vector<8x33xf32>
    %242 = arith.addf %208, %241 : vector<8x33xf32>
    %243 = arith.addf %1, %242 : vector<8x33xf32>
    %244 = arith.addf %182, %243 : vector<8x33xf32>
    %c3_i32 = arith.constant 3 : i32
    %245 = vector.broadcast %c3_i32 : i32 to vector<8x1xi32>
    %246 = arith.cmpi eq, %2, %245 : vector<8x1xi32>
    %247 = vector.shape_cast %246 : vector<8x1xi1> to vector<8x1xi1>
    %248 = vector.broadcast %247 : vector<8x1xi1> to vector<8x33xi1>
    %249 = arith.select %248, %243, %187 : vector<8x33xi1>, vector<8x33xf32>
    %250 = arith.mulf %238, %238 : vector<8x33xf32>
    %cst_119 = arith.constant dense<0.000000e+00> : vector<8xf32>
    %251 = vector.multi_reduction <add>, %250, %cst_119 [1] : vector<8x33xf32> to vector<8xf32>
    %252 = vector.shape_cast %251 : vector<8xf32> to vector<8x1xf32>
    %253 = arith.maximumf %191, %252 : vector<8x1xf32>
    %c4 = arith.constant 4 : index
    %c0_120 = arith.constant 0 : index
    %c0_121 = arith.constant 0 : index
    %254 = vector.load %arg3[%c4, %c0_120, %c0_121] : memref<5x48x64xf32, #tpu.memory_space<vmem>>, vector<1x48x64xf32>
    %255 = vector.shape_cast %254 : vector<1x48x64xf32> to vector<48x64xf32>
    %cst_122 = arith.constant dense<0.000000e+00> : vector<8x64xf32>
    %256 = tpu.matmul %0, %255, %cst_122 {dimension_numbers = #tpu.dot_dimension_numbers<[1], [0], [0], [1], [0, 0, 1, 1], [], []>} : vector<8x48xf32>, vector<48x64xf32>, vector<8x64xf32> -> vector<8x64xf32>
    %c4_123 = arith.constant 4 : index
    %c0_124 = arith.constant 0 : index
    %c0_125 = arith.constant 0 : index
    %257 = vector.load %arg4[%c4_123, %c0_124, %c0_125] : memref<5x1x64xf32, #tpu.memory_space<vmem>>, vector<1x1x64xf32>
    %258 = vector.shape_cast %257 : vector<1x1x64xf32> to vector<1x64xf32>
    %259 = vector.broadcast %258 : vector<1x64xf32> to vector<8x64xf32>
    %260 = arith.addf %256, %259 : vector<8x64xf32>
    %cst_126 = arith.constant 0.000000e+00 : f32
    %261 = vector.broadcast %cst_126 : f32 to vector<8x64xf32>
    %262 = arith.maximumf %260, %261 : vector<8x64xf32>
    %c4_127 = arith.constant 4 : index
    %c0_128 = arith.constant 0 : index
    %c0_129 = arith.constant 0 : index
    %263 = vector.load %arg5[%c4_127, %c0_128, %c0_129] : memref<5x64x66xf32, #tpu.memory_space<vmem>>, vector<1x64x66xf32>
    %264 = vector.shape_cast %263 : vector<1x64x66xf32> to vector<64x66xf32>
    %cst_130 = arith.constant dense<0.000000e+00> : vector<8x66xf32>
    %265 = tpu.matmul %262, %264, %cst_130 {dimension_numbers = #tpu.dot_dimension_numbers<[1], [0], [0], [1], [0, 0, 1, 1], [], []>} : vector<8x64xf32>, vector<64x66xf32>, vector<8x66xf32> -> vector<8x66xf32>
    %c4_131 = arith.constant 4 : index
    %c0_132 = arith.constant 0 : index
    %c0_133 = arith.constant 0 : index
    %266 = vector.load %arg6[%c4_131, %c0_132, %c0_133] : memref<5x1x66xf32, #tpu.memory_space<vmem>>, vector<1x1x66xf32>
    %267 = vector.shape_cast %266 : vector<1x1x66xf32> to vector<1x66xf32>
    %268 = vector.broadcast %267 : vector<1x66xf32> to vector<8x66xf32>
    %269 = arith.addf %265, %268 : vector<8x66xf32>
    %270 = vector.extract_strided_slice %269 {offsets = [0, 0], sizes = [8, 33], strides = [1, 1]} : vector<8x66xf32> to vector<8x33xf32>
    %271 = vector.extract_strided_slice %269 {offsets = [0, 33], sizes = [8, 33], strides = [1, 1]} : vector<8x66xf32> to vector<8x33xf32>
    %cst_134 = arith.constant 2.000000e+00 : f32
    %272 = vector.broadcast %cst_134 : f32 to vector<8x33xf32>
    %273 = arith.subf %272, %271 : vector<8x33xf32>
    %cst_135 = arith.constant 0.000000e+00 : f32
    %274 = vector.broadcast %cst_135 : f32 to vector<8x33xf32>
    %275 = arith.maximumf %273, %274 : vector<8x33xf32>
    %276 = math.absf %273 : vector<8x33xf32>
    %cst_136 = arith.constant 0.000000e+00 : f32
    %277 = vector.broadcast %cst_136 : f32 to vector<8x33xf32>
    %278 = arith.subf %277, %276 : vector<8x33xf32>
    %279 = math.exp %278 : vector<8x33xf32>
    %cst_137 = arith.constant 1.000000e+00 : f32
    %280 = vector.broadcast %cst_137 : f32 to vector<8x33xf32>
    %281 = arith.addf %280, %279 : vector<8x33xf32>
    %282 = math.log %281 : vector<8x33xf32>
    %283 = arith.addf %275, %282 : vector<8x33xf32>
    %cst_138 = arith.constant 2.000000e+00 : f32
    %284 = vector.broadcast %cst_138 : f32 to vector<8x33xf32>
    %285 = arith.subf %284, %283 : vector<8x33xf32>
    %cst_139 = arith.constant -1.000000e+01 : f32
    %286 = vector.broadcast %cst_139 : f32 to vector<8x33xf32>
    %287 = arith.subf %285, %286 : vector<8x33xf32>
    %cst_140 = arith.constant 0.000000e+00 : f32
    %288 = vector.broadcast %cst_140 : f32 to vector<8x33xf32>
    %289 = arith.maximumf %287, %288 : vector<8x33xf32>
    %290 = math.absf %287 : vector<8x33xf32>
    %cst_141 = arith.constant 0.000000e+00 : f32
    %291 = vector.broadcast %cst_141 : f32 to vector<8x33xf32>
    %292 = arith.subf %291, %290 : vector<8x33xf32>
    %293 = math.exp %292 : vector<8x33xf32>
    %cst_142 = arith.constant 1.000000e+00 : f32
    %294 = vector.broadcast %cst_142 : f32 to vector<8x33xf32>
    %295 = arith.addf %294, %293 : vector<8x33xf32>
    %296 = math.log %295 : vector<8x33xf32>
    %297 = arith.addf %289, %296 : vector<8x33xf32>
    %cst_143 = arith.constant -1.000000e+01 : f32
    %298 = vector.broadcast %cst_143 : f32 to vector<8x33xf32>
    %299 = arith.addf %298, %297 : vector<8x33xf32>
    %300 = math.exp %299 : vector<8x33xf32>
    %c4_144 = arith.constant 4 : index
    %c0_145 = arith.constant 0 : index
    %c0_146 = arith.constant 0 : index
    %301 = vector.load %arg7[%c4_144, %c0_145, %c0_146] : memref<5x8x33xf32, #tpu.memory_space<vmem>>, vector<1x8x33xf32>
    %302 = vector.shape_cast %301 : vector<1x8x33xf32> to vector<8x33xf32>
    %303 = arith.mulf %300, %302 : vector<8x33xf32>
    %304 = arith.addf %270, %303 : vector<8x33xf32>
    %305 = arith.addf %1, %304 : vector<8x33xf32>
    %306 = arith.addf %244, %305 : vector<8x33xf32>
    %c4_i32 = arith.constant 4 : i32
    %307 = vector.broadcast %c4_i32 : i32 to vector<8x1xi32>
    %308 = arith.cmpi eq, %2, %307 : vector<8x1xi32>
    %309 = vector.shape_cast %308 : vector<8x1xi1> to vector<8x1xi1>
    %310 = vector.broadcast %309 : vector<8x1xi1> to vector<8x33xi1>
    %311 = arith.select %310, %305, %249 : vector<8x33xi1>, vector<8x33xf32>
    %312 = arith.mulf %300, %300 : vector<8x33xf32>
    %cst_147 = arith.constant dense<0.000000e+00> : vector<8xf32>
    %313 = vector.multi_reduction <add>, %312, %cst_147 [1] : vector<8x33xf32> to vector<8xf32>
    %314 = vector.shape_cast %313 : vector<8xf32> to vector<8x1xf32>
    %315 = arith.maximumf %253, %314 : vector<8x1xf32>
    %c0_148 = arith.constant 0 : index
    %c0_149 = arith.constant 0 : index
    %316 = vector.load %arg8[%c0_148, %c0_149] : memref<8x33xf32, #tpu.memory_space<vmem>>, vector<8x33xf32>
    tpu.vector_store %arg8[%c0_148, %c0_149], %311 {strides = array<i32>} : memref<8x33xf32, #tpu.memory_space<vmem>>, vector<8x33xf32>,
    %cst_150 = arith.constant 2.000000e-01 : f32
    %317 = vector.broadcast %cst_150 : f32 to vector<8x33xf32>
    %318 = arith.mulf %306, %317 : vector<8x33xf32>
    %cst_151 = arith.constant 0.000000e+00 : f32
    %319 = vector.broadcast %cst_151 : f32 to vector<8x33xf32>
    %320 = arith.subf %57, %318 : vector<8x33xf32>
    %321 = arith.mulf %320, %320 : vector<8x33xf32>
    %322 = arith.addf %319, %321 : vector<8x33xf32>
    %323 = arith.subf %119, %318 : vector<8x33xf32>
    %324 = arith.mulf %323, %323 : vector<8x33xf32>
    %325 = arith.addf %322, %324 : vector<8x33xf32>
    %326 = arith.subf %181, %318 : vector<8x33xf32>
    %327 = arith.mulf %326, %326 : vector<8x33xf32>
    %328 = arith.addf %325, %327 : vector<8x33xf32>
    %329 = arith.subf %243, %318 : vector<8x33xf32>
    %330 = arith.mulf %329, %329 : vector<8x33xf32>
    %331 = arith.addf %328, %330 : vector<8x33xf32>
    %332 = arith.subf %305, %318 : vector<8x33xf32>
    %333 = arith.mulf %332, %332 : vector<8x33xf32>
    %334 = arith.addf %331, %333 : vector<8x33xf32>
    %cst_152 = arith.constant dense<0.000000e+00> : vector<8xf32>
    %335 = vector.multi_reduction <add>, %334, %cst_152 [1] : vector<8x33xf32> to vector<8xf32>
    %336 = vector.shape_cast %335 : vector<8xf32> to vector<8x1xf32>
    %cst_153 = arith.constant 2.500000e-01 : f32
    %337 = vector.broadcast %cst_153 : f32 to vector<8x1xf32>
    %338 = arith.mulf %336, %337 : vector<8x1xf32>
    %c0_154 = arith.constant 0 : index
    %c0_155 = arith.constant 0 : index
    %339 = vector.load %arg9[%c0_154, %c0_155] : memref<8x1xf32, #tpu.memory_space<vmem>>, vector<8x1xf32>
    tpu.vector_store %arg9[%c0_154, %c0_155], %338 {strides = array<i32>} : memref<8x1xf32, #tpu.memory_space<vmem>>, vector<8x1xf32>,
    %c0_156 = arith.constant 0 : index
    %c0_157 = arith.constant 0 : index
    %340 = vector.load %arg10[%c0_156, %c0_157] : memref<8x1xf32, #tpu.memory_space<vmem>>, vector<8x1xf32>
    tpu.vector_store %arg10[%c0_156, %c0_157], %315 {strides = array<i32>} : memref<8x1xf32, #tpu.memory_space<vmem>>, vector<8x1xf32>,
    return
  }
}

</mosaic_0001>

<llo_original>
// kernel: ensemble_dynamics_forward.1
$region0: #{ensemble_dynamics_forward.1}
  #allocation0 [shape = 'u32[]', space=smem, size = 0x4, offset = 0x4, fixed_abs, tag = 'smem constant byte address 0x4 - core index']
  #allocation1 [shape = 'u32[144,128]{1,0:T(1,128)}', space=vmem, size = 0x12000, scoped, tag = 'internal scratch']
  %s0 = inlined_call_operand.vmem [shape: f32[8,48], index: 0, kind: input, shape index: {}]
  %s1 = inlined_call_operand.vmem [shape: f32[8,33], index: 1, kind: input, shape index: {}]
  %s2 = inlined_call_operand.vmem [shape: s32[8,1], index: 2, kind: input, shape index: {}]
  %s3 = inlined_call_operand.hbm [shape: f32[5,48,64], index: 3, kind: input, shape index: {}]
  %s4 = inlined_call_operand.vmem [shape: f32[5,1,64], index: 4, kind: input, shape index: {}]
  %s5 = inlined_call_operand.hbm [shape: f32[5,64,66], index: 5, kind: input, shape index: {}]
  %s6 = inlined_call_operand.vmem [shape: f32[5,1,66], index: 6, kind: input, shape index: {}]
  %s7 = inlined_call_operand.vmem [shape: f32[5,8,33], index: 7, kind: input, shape index: {}]
  %s8 = inlined_call_operand.vmem [shape: f32[8,33], index: 8, kind: output, shape index: {0}]
  %s9 = inlined_call_operand.vmem [shape: f32[8,1], index: 9, kind: output, shape index: {1}]
  %s10 = inlined_call_operand.hbm [shape: f32[8,1], index: 10, kind: output, shape index: {2}]
  %11 = xla_tuple %s8, %s9, %s10
  %s12 = sld [smem:[#allocation0]]
  $region66: #{ensemble_dynamics_forward.1} parent=0
    _
  %s14 = ssub.s32 1, %s12
  %s15 = scalar_select 0, %s14, %s12
  $region1: #{ensemble_dynamics_forward.1} parent=0
    #allocation2 [shape = 'u8[122880]{0}', space=vmem, size = 0x1e000, scoped, tag = 'input window, operand 3, single buffered']
    #allocation3 [shape = 's32[1]{0}', space=sflag, size = 0x4, scoped, tag = 'scoped memory for ensemble_dynamics_forward.1']
    #allocation4 [shape = 's32[1]{0}', space=sflag, size = 0x4, scoped, tag = 'scoped memory for ensemble_dynamics_forward.1']
    #allocation5 [shape = 'u8[163840]{0}', space=vmem, size = 0x28000, scoped, tag = 'input window, operand 5, single buffered']
    #allocation6 [shape = 's32[1]{0}', space=sflag, size = 0x4, scoped, tag = 'scoped memory for ensemble_dynamics_forward.1']
    #allocation7 [shape = 'u8[4096]{0}', space=vmem, size = 0x1000, scoped, tag = 'output window, operand 2, single buffered']
    %16 = vsyncpa [#allocation3], 0
    %17 = vsyncpa [#allocation6], 0
    %18 = vsyncpa [#allocation4], 0
    // Predicated region
    $region2: #{ensemble_dynamics_forward.1} parent=1 // pred_check
      _
    $region3: #{ensemble_dynamics_forward.1} parent=1 // pred_check_branch
      %20 = sbr.rel (0) target = $region5
    $region4: #{ensemble_dynamics_forward.1} parent=1 // pred_region
      _
    $region5: #{ensemble_dynamics_forward.1} parent=1 // pred_fallthru
      _
    // Predicated region
    $region6: #{ensemble_dynamics_forward.1} parent=1 // pred_check
      _
    $region7: #{ensemble_dynamics_forward.1} parent=1 // pred_check_branch
      %22 = sbr.rel (0) target = $region9
    $region8: #{ensemble_dynamics_forward.1} parent=1 // pred_region
      _
    $region9: #{ensemble_dynamics_forward.1} parent=1 // pred_fallthru
      _
    // Predicated region
    $region10: #{ensemble_dynamics_forward.1} parent=1 // pred_check
      _
    $region11: #{ensemble_dynamics_forward.1} parent=1 // pred_check_branch
      %24 = sbr.rel (0) target = $region13
    $region12: #{ensemble_dynamics_forward.1} parent=1 // pred_region
      _
    $region13: #{ensemble_dynamics_forward.1} parent=1 // pred_fallthru
      _
    // Predicated region
    $region14: #{ensemble_dynamics_forward.1} parent=1 // pred_check
      _
    $region15: #{ensemble_dynamics_forward.1} parent=1 // pred_check_branch
      %26 = sbr.rel (0) target = $region17
    $region16: #{ensemble_dynamics_forward.1} parent=1 // pred_region
      %s28 = ssub.s32 3840, 3840
      %29 = vsyncadd [#allocation3], %s28
      %s30 = sshll.u32 [#allocation2], 4
      %s31 = int_to_ptr.vmem [resolvable:$true] %s30
      %36 = dma.hbm_to_vmem [thread:$0]  %s3, 3840, %s31, [#allocation3], 128, 128, 8
    $region17: #{ensemble_dynamics_forward.1} parent=1 // pred_fallthru
      _
    // Predicated region
    $region18: #{ensemble_dynamics_forward.1} parent=1 // pred_check
      _
    $region19: #{ensemble_dynamics_forward.1} parent=1 // pred_check_branch
      %38 = sbr.rel (0) target = $region21
    $region20: #{ensemble_dynamics_forward.1} parent=1 // pred_region
      _
    $region21: #{ensemble_dynamics_forward.1} parent=1 // pred_fallthru
      _
    // Predicated region
    $region22: #{ensemble_dynamics_forward.1} parent=1 // pred_check
      _
    $region23: #{ensemble_dynamics_forward.1} parent=1 // pred_check_branch
      %40 = sbr.rel (0) target = $region25
    $region24: #{ensemble_dynamics_forward.1} parent=1 // pred_region
      %s42 = ssub.s32 5120, 5120
      %43 = vsyncadd [#allocation6], %s42
      %s44 = sshll.u32 [#allocation5], 4
      %s45 = int_to_ptr.vmem [resolvable:$true] %s44
      %50 = dma.hbm_to_vmem [thread:$0]  %s5, 5120, %s45, [#allocation6], 128, 128, 8
    $region25: #{ensemble_dynamics_forward.1} parent=1 // pred_fallthru
      _
    // Predicated region
    $region26: #{ensemble_dynamics_forward.1} parent=1 // pred_check
      _
    $region27: #{ensemble_dynamics_forward.1} parent=1 // pred_check_branch
      %52 = sbr.rel (0) target = $region29
    $region28: #{ensemble_dynamics_forward.1} parent=1 // pred_region
      _
    $region29: #{ensemble_dynamics_forward.1} parent=1 // pred_fallthru
      _
    // Predicated region
    $region30: #{ensemble_dynamics_forward.1} parent=1 // pred_check
      _
    $region31: #{ensemble_dynamics_forward.1} parent=1 // pred_check_branch
      %54 = sbr.rel (0) target = $region33
    $region32: #{ensemble_dynamics_forward.1} parent=1 // pred_region
      _
    $region33: #{ensemble_dynamics_forward.1} parent=1 // pred_fallthru
      _
    // Predicated region
    $region34: #{ensemble_dynamics_forward.1} parent=1 // pred_check
      _
    $region35: #{ensemble_dynamics_forward.1} parent=1 // pred_check_branch
      %56 = sbr.rel (0) target = $region37
    $region36: #{ensemble_dynamics_forward.1} parent=1 // pred_region
      %57 = dma.done [#allocation3], 3840
    $region37: #{ensemble_dynamics_forward.1} parent=1 // pred_fallthru
      _
    // Predicated region
    $region38: #{ensemble_dynamics_forward.1} parent=1 // pred_check
      _
    $region39: #{ensemble_dynamics_forward.1} parent=1 // pred_check_branch
      %59 = sbr.rel (0) target = $region41
    $region40: #{ensemble_dynamics_forward.1} parent=1 // pred_region
      %60 = dma.done [#allocation6], 5120
    $region41: #{ensemble_dynamics_forward.1} parent=1 // pred_fallthru
      _
    %v61 = vld [vmem:[%s0] sm:$0xff]
    %v62 = vld [vmem:[%s1] sm:$0xff]
    %v63 = vld [vmem:[%s2] sm:$0xff]
    %v64 = vld [vmem:[#allocation2] sm:$0xff]
    %v65 = vld [vmem:[#allocation2 + $0x8] sm:$0xff]
    %v66 = vld [vmem:[#allocation2 + $0x10] sm:$0xff]
    %v67 = vld [vmem:[#allocation2 + $0x18] sm:$0xff]
    %v68 = vld [vmem:[#allocation2 + $0x20] sm:$0xff]
    %v69 = vld [vmem:[#allocation2 + $0x28] sm:$0xff]
    %v70 = vld [vmem:[%s4] sm:$0x1]
    %v72 = vlaneseq
    %v73 = vshrl.u32 %v72, 7
    %v74 = vsub.s32 0, %v73
    %v75 = vrot.slane %v70, %v74
    %vm77 = vcmask 392192
    %v79 = vsel %vm77, %v61, 0
    %81 = vmatprep.subr.mxu0 0.0
    %82 = vmatpush1.msra.mxu0 %v64
    %83 = vmatprep.subr.mxu0 0.0
    %84 = vmatpush1.msra.mxu0 %v65
    %85 = vmatprep.subr.mxu0 0.0
    %86 = vmatpush1.msra.mxu0 %v66
    %87 = vmatprep.subr.mxu0 0.0
    %88 = vmatpush1.msra.mxu0 %v67
    %89 = vmatprep.subr.mxu0 0.0
    %90 = vmatpush1.msra.mxu0 %v68
    %91 = vmatprep.subr.mxu0 0.0
    %92 = vmatpush1.msra.mxu0 %v69
    %93 = vmatprep.subr.mxu0 0.0
    %94 = vmatpush1.msra.mxu0 0.0
    %95 = vmatprep.subr.mxu0 0.0
    %96 = vmatpush1.msra.mxu0 0.0
    %97 = vmatprep.subr.mxu0 0.0
    %98 = vmatpush1.msra.mxu0 0.0
    %99 = vmatprep.subr.mxu0 0.0
    %100 = vmatpush1.msra.mxu0 0.0
    %101 = vmatprep.subr.mxu0 0.0
    %102 = vmatpush1.msra.mxu0 0.0
    %103 = vmatprep.subr.mxu0 0.0
    %104 = vmatpush1.msra.mxu0 0.0
    %105 = vmatprep.subr.mxu0 0.0
    %106 = vmatpush1.msra.mxu0 0.0
    %107 = vmatprep.subr.mxu0 0.0
    %108 = vmatpush1.msra.mxu0 0.0
    %109 = vmatprep.subr.mxu0 0.0
    %110 = vmatpush1.msra.mxu0 0.0
    %111 = vmatprep.subr.mxu0 0.0
    %112 = vmatpush1.msra.mxu0 0.0
    %113 = vmatprep.subr.mxu0 0.0
    %114 = vmatpush1.msra.mxu0 0.0
    %115 = vmatprep.subr.mxu0 0.0
    %116 = vmatpush1.msra.mxu0 0.0
    %117 = vmatprep.subr.mxu0 0.0
    %118 = vmatpush1.msra.mxu0 0.0
    %119 = vmatprep.subr.mxu0 0.0
    %120 = vmatpush1.msra.mxu0 0.0
    %121 = vmatprep.subr.mxu0 0.0
    %122 = vmatpush1.msra.mxu0 0.0
    %123 = vmatprep.subr.mxu0 0.0
    %124 = vmatpush1.msra.mxu0 0.0
    %125 = vmatprep.subr.mxu0 0.0
    %126 = vmatpush1.msra.mxu0 0.0
    %127 = vmatprep.subr.mxu0 0.0
    %128 = vmatpush1.msra.mxu0 0.0
    %129 = vmatprep.subr.mxu0 0.0
    %130 = vmatpush1.msra.mxu0 0.0
    %131 = vmatprep.subr.mxu0 0.0
    %132 = vmatpush1.msra.mxu0 0.0
    %133 = vmatprep.subr.mxu0 0.0
    %134 = vmatpush1.msra.mxu0 0.0
    %135 = vmatprep.subr.mxu0 0.0
    %136 = vmatpush1.msra.mxu0 0.0
    %137 = vmatprep.subr.mxu0 0.0
    %138 = vmatpush1.msra.mxu0 0.0
    %139 = vmatprep.subr.mxu0 0.0
    %140 = vmatpush1.msra.mxu0 0.0
    %141 = vmatprep.subr.mxu0 0.0
    %142 = vmatpush1.msra.mxu0 0.0
    %143 = vmatprep.subr.mxu0 0.0
    %144 = vmatpush1.msra.mxu0 0.0
    %145 = vmatprep.mubr.f32.mxu0 0.0
    %146 = vmatmul.mubr.f32.gmra.mrb[0].mxu0 %v79
    %v147 = vpop.f32.mrb[0].mxu0
    %v148 = vadd.f32 %v75, %v147
    %v149 = vpop.f32.mrb[0].mxu0
    %150 = vdwg.mxu0
    %v151 = vmax.f32 %v148, 0.0
    %v152 = vld [vmem:[#allocation5] sm:$0xff]
    %v153 = vld [vmem:[#allocation5 + $0x8] sm:$0xff]
    %v154 = vld [vmem:[#allocation5 + $0x10] sm:$0xff]
    %v155 = vld [vmem:[#allocation5 + $0x18] sm:$0xff]
    %v156 = vld [vmem:[#allocation5 + $0x20] sm:$0xff]
    %v157 = vld [vmem:[#allocation5 + $0x28] sm:$0xff]
    %v158 = vld [vmem:[#allocation5 + $0x30] sm:$0xff]
    %v159 = vld [vmem:[#allocation5 + $0x38] sm:$0xff]
    %v160 = vld [vmem:[%s6] sm:$0x1]
    %v162 = vlaneseq
    %v163 = vshrl.u32 %v162, 7
    %v164 = vsub.s32 0, %v163
    %v165 = vrot.slane %v160, %v164
    %vm167 = vcmask 523264
    %v169 = vsel %vm167, %v151, 0
    %171 = vmatprep.subr.mxu0 0.0
    %172 = vmatpush1.msra.mxu0 %v152
    %173 = vmatprep.subr.mxu0 0.0
    %174 = vmatpush1.msra.mxu0 %v153
    %175 = vmatprep.subr.mxu0 0.0
    %176 = vmatpush1.msra.mxu0 %v154
    %177 = vmatprep.subr.mxu0 0.0
    %178 = vmatpush1.msra.mxu0 %v155
    %179 = vmatprep.subr.mxu0 0.0
    %180 = vmatpush1.msra.mxu0 %v156
    %181 = vmatprep.subr.mxu0 0.0
    %182 = vmatpush1.msra.mxu0 %v157
    %183 = vmatprep.subr.mxu0 0.0
    %184 = vmatpush1.msra.mxu0 %v158
    %185 = vmatprep.subr.mxu0 0.0
    %186 = vmatpush1.msra.mxu0 %v159
    %187 = vmatprep.subr.mxu0 0.0
    %188 = vmatpush1.msra.mxu0 0.0
    %189 = vmatprep.subr.mxu0 0.0
    %190 = vmatpush1.msra.mxu0 0.0
    %191 = vmatprep.subr.mxu0 0.0
    %192 = vmatpush1.msra.mxu0 0.0
    %193 = vmatprep.subr.mxu0 0.0
    %194 = vmatpush1.msra.mxu0 0.0
    %195 = vmatprep.subr.mxu0 0.0
    %196 = vmatpush1.msra.mxu0 0.0
    %197 = vmatprep.subr.mxu0 0.0
    %198 = vmatpush1.msra.mxu0 0.0
    %199 = vmatprep.subr.mxu0 0.0
    %200 = vmatpush1.msra.mxu0 0.0
    %201 = vmatprep.subr.mxu0 0.0
    %202 = vmatpush1.msra.mxu0 0.0
    %203 = vmatprep.subr.mxu0 0.0
    %204 = vmatpush1.msra.mxu0 0.0
    %205 = vmatprep.subr.mxu0 0.0
    %206 = vmatpush1.msra.mxu0 0.0
    %207 = vmatprep.subr.mxu0 0.0
    %208 = vmatpush1.msra.mxu0 0.0
    %209 = vmatprep.subr.mxu0 0.0
    %210 = vmatpush1.msra.mxu0 0.0
    %211 = vmatprep.subr.mxu0 0.0
    %212 = vmatpush1.msra.mxu0 0.0
    %213 = vmatprep.subr.mxu0 0.0
    %214 = vmatpush1.msra.mxu0 0.0
    %215 = vmatprep.subr.mxu0 0.0
    %216 = vmatpush1.msra.mxu0 0.0
    %217 = vmatprep.subr.mxu0 0.0
    %218 = vmatpush1.msra.mxu0 0.0
    %219 = vmatprep.subr.mxu0 0.0
    %220 = vmatpush1.msra.mxu0 0.0
    %221 = vmatprep.subr.mxu0 0.0
    %222 = vmatpush1.msra.mxu0 0.0
    %223 = vmatprep.subr.mxu0 0.0
    %224 = vmatpush1.msra.mxu0 0.0
    %225 = vmatprep.subr.mxu0 0.0
    %226 = vmatpush1.msra.mxu0 0.0
    %227 = vmatprep.subr.mxu0 0.0
    %228 = vmatpush1.msra.mxu0 0.0
    %229 = vmatprep.subr.mxu0 0.0
    %230 = vmatpush1.msra.mxu0 0.0
    %231 = vmatprep.subr.mxu0 0.0
    %232 = vmatpush1.msra.mxu0 0.0
    %233 = vmatprep.subr.mxu0 0.0
    %234 = vmatpush1.msra.mxu0 0.0
    %235 = vmatprep.mubr.f32.mxu0 0.0
    %236 = vmatmul.mubr.f32.gmra.mrb[0].mxu0 %v169
    %v237 = vpop.f32.mrb[0].mxu0
    %v238 = vadd.f32 %v165, %v237
    %v239 = vpop.f32.mrb[0].mxu0
    %240 = vdwg.mxu0
    %v241 = vsub.f32 2.0, %v238
    %v242 = vmax.f32 %v241, 0.0
    %v243 = vand.u32 2147483647, %v241
    %v244 = vsub.f32 0.0, %v243
    %v245 = vmul.f32 %v244, 1.442695
    %v246 = vpow.pop %v245
    %v247 = vadd.f32 %v246, 1.0
    %v248 = vlog2.pop %v247
    %v249 = vmul.f32 %v248, 0.6931472
    %v250 = vadd.f32 %v242, %v249
    %v251 = vsub.f32 2.0, %v250
    %v252 = vsub.f32 %v251, -10.0
    %v253 = vmax.f32 %v252, 0.0
    %v254 = vand.u32 2147483647, %v252
    %v255 = vsub.f32 0.0, %v254
    %v256 = vmul.f32 %v255, 1.442695
    %v257 = vpow.pop %v256
    %v258 = vadd.f32 %v257, 1.0
    %v259 = vlog2.pop %v258
    %v260 = vmul.f32 %v259, 0.6931472
    %v261 = vadd.f32 %v253, %v260
    %v262 = vadd.f32 %v261, -10.0
    %v263 = vmul.f32 %v262, 1.442695
    %v264 = vpow.pop %v263
    %v265 = vld [vmem:[%s7] sm:$0xff]
    %267 = vrot.lane.b32.xlu0 %v265, 33
    %v268 = vpop.permute.xlu0 %267
    %v270 = vmul.f32 %v264, %v268
    %272 = vrot.lane.b32.xlu0 %v270, 95
    %v273 = vpop.permute.xlu0 %272
    %v275 = vadd.f32 %v238, %v273
    %v276 = vadd.f32 %v62, %v275
    %v277 = vadd.f32 %v276, 0.0
    %vm278 = vcmp.eq.s32.totalorder %v63, 0
    %v279 = vsel %vm278, 1, 0
    %280 = vset.pattern.permute.xlu0 0
    %281 = vperm.xlu0 %280, %v279
    %v282 = vpop.permute.xlu0 %281
    %vm283 = vcmp.eq.s32.totalorder %v282, 1
    %v284 = vsel %vm283, %v276, 0.0
    %v285 = vmul.f32 %v264, %v264
    %287 = vrot.lane.b32.xlu0 %v285, 95
    %v288 = vpop.permute.xlu0 %287
    %vm290 = vcmask 269312
    %v291 = vsel %vm290, %v288, 0.0
    %292 = vadd.xlane.f32.xlu0 %v291
    %v293 = vpop.xlane.xlu0 %292
    %v294 = vmax.f32 %v293, 0.0
    %s295 = scalar_lea.vmem [#allocation2], 48
    %v296 = vld [vmem:[%s295] sm:$0xff]
    %v297 = vld [vmem:[%s295 + $0x8] sm:$0xff]
    %v298 = vld [vmem:[%s295 + $0x10] sm:$0xff]
    %v299 = vld [vmem:[%s295 + $0x18] sm:$0xff]
    %v300 = vld [vmem:[%s295 + $0x20] sm:$0xff]
    %v301 = vld [vmem:[%s295 + $0x28] sm:$0xff]
    %s302 = scalar_lea.vmem %s4, 1
    %v303 = vld [vmem:[%s302] sm:$0x1]
    %v305 = vlaneseq
    %v306 = vshrl.u32 %v305, 7
    %v307 = vsub.s32 0, %v306
    %v308 = vrot.slane %v303, %v307
    %310 = vmatprep.subr.mxu0 0.0
    %311 = vmatpush1.msra.mxu0 %v296
    %312 = vmatprep.subr.mxu0 0.0
    %313 = vmatpush1.msra.mxu0 %v297
    %314 = vmatprep.subr.mxu0 0.0
    %315 = vmatpush1.msra.mxu0 %v298
    %316 = vmatprep.subr.mxu0 0.0
    %317 = vmatpush1.msra.mxu0 %v299
    %318 = vmatprep.subr.mxu0 0.0
    %319 = vmatpush1.msra.mxu0 %v300
    %320 = vmatprep.subr.mxu0 0.0
    %321 = vmatpush1.msra.mxu0 %v301
    %322 = vmatprep.subr.mxu0 0.0
    %323 = vmatpush1.msra.mxu0 0.0
    %324 = vmatprep.subr.mxu0 0.0
    %325 = vmatpush1.msra.mxu0 0.0
    %326 = vmatprep.subr.mxu0 0.0
    %327 = vmatpush1.msra.mxu0 0.0
    %328 = vmatprep.subr.mxu0 0.0
    %329 = vmatpush1.msra.mxu0 0.0
    %330 = vmatprep.subr.mxu0 0.0
    %331 = vmatpush1.msra.mxu0 0.0
    %332 = vmatprep.subr.mxu0 0.0
    %333 = vmatpush1.msra.mxu0 0.0
    %334 = vmatprep.subr.mxu0 0.0
    %335 = vmatpush1.msra.mxu0 0.0
    %336 = vmatprep.subr.mxu0 0.0
    %337 = vmatpush1.msra.mxu0 0.0
    %338 = vmatprep.subr.mxu0 0.0
    %339 = vmatpush1.msra.mxu0 0.0
    %340 = vmatprep.subr.mxu0 0.0
    %341 = vmatpush1.msra.mxu0 0.0
    %342 = vmatprep.subr.mxu0 0.0
    %343 = vmatpush1.msra.mxu0 0.0
    %344 = vmatprep.subr.mxu0 0.0
    %345 = vmatpush1.msra.mxu0 0.0
    %346 = vmatprep.subr.mxu0 0.0
    %347 = vmatpush1.msra.mxu0 0.0
    %348 = vmatprep.subr.mxu0 0.0
    %349 = vmatpush1.msra.mxu0 0.0
    %350 = vmatprep.subr.mxu0 0.0
    %351 = vmatpush1.msra.mxu0 0.0
    %352 = vmatprep.subr.mxu0 0.0
    %353 = vmatpush1.msra.mxu0 0.0
    %354 = vmatprep.subr.mxu0 0.0
    %355 = vmatpush1.msra.mxu0 0.0
    %356 = vmatprep.subr.mxu0 0.0
    %357 = vmatpush1.msra.mxu0 0.0
    %358 = vmatprep.subr.mxu0 0.0
    %359 = vmatpush1.msra.mxu0 0.0
    %360 = vmatprep.subr.mxu0 0.0
    %361 = vmatpush1.msra.mxu0 0.0
    %362 = vmatprep.subr.mxu0 0.0
    %363 = vmatpush1.msra.mxu0 0.0
    %364 = vmatprep.subr.mxu0 0.0
    %365 = vmatpush1.msra.mxu0 0.0
    %366 = vmatprep.subr.mxu0 0.0
    %367 = vmatpush1.msra.mxu0 0.0
    %368 = vmatprep.subr.mxu0 0.0
    %369 = vmatpush1.msra.mxu0 0.0
    %370 = vmatprep.subr.mxu0 0.0
    %371 = vmatpush1.msra.mxu0 0.0
    %372 = vmatprep.subr.mxu0 0.0
    %373 = vmatpush1.msra.mxu0 0.0
    %374 = vmatprep.mubr.f32.mxu0 0.0
    %375 = vmatmul.mubr.f32.gmra.mrb[0].mxu0 %v79
    %v376 = vpop.f32.mrb[0].mxu0
    %v377 = vadd.f32 %v308, %v376
    %v378 = vpop.f32.mrb[0].mxu0
    %379 = vdwg.mxu0
    %v380 = vmax.f32 %v377, 0.0
    %s381 = scalar_lea.vmem [#allocation5], 64
    %v382 = vld [vmem:[%s381] sm:$0xff]
    %v383 = vld [vmem:[%s381 + $0x8] sm:$0xff]
    %v384 = vld [vmem:[%s381 + $0x10] sm:$0xff]
    %v385 = vld [vmem:[%s381 + $0x18] sm:$0xff]
    %v386 = vld [vmem:[%s381 + $0x20] sm:$0xff]
    %v387 = vld [vmem:[%s381 + $0x28] sm:$0xff]
    %v388 = vld [vmem:[%s381 + $0x30] sm:$0xff]
    %v389 = vld [vmem:[%s381 + $0x38] sm:$0xff]
    %s390 = scalar_lea.vmem %s6, 1
    %v391 = vld [vmem:[%s390] sm:$0x1]
    %v393 = vlaneseq
    %v394 = vshrl.u32 %v393, 7
    %v395 = vsub.s32 0, %v394
    %v396 = vrot.slane %v391, %v395
    %v399 = vsel %vm167, %v380, 0
    %401 = vmatprep.subr.mxu0 0.0
    %402 = vmatpush1.msra.mxu0 %v382
    %403 = vmatprep.subr.mxu0 0.0
    %404 = vmatpush1.msra.mxu0 %v383
    %405 = vmatprep.subr.mxu0 0.0
    %406 = vmatpush1.msra.mxu0 %v384
    %407 = vmatprep.subr.mxu0 0.0
    %408 = vmatpush1.msra.mxu0 %v385
    %409 = vmatprep.subr.mxu0 0.0
    %410 = vmatpush1.msra.mxu0 %v386
    %411 = vmatprep.subr.mxu0 0.0
    %412 = vmatpush1.msra.mxu0 %v387
    %413 = vmatprep.subr.mxu0 0.0
    %414 = vmatpush1.msra.mxu0 %v388
    %415 = vmatprep.subr.mxu0 0.0
    %416 = vmatpush1.msra.mxu0 %v389
    %417 = vmatprep.subr.mxu0 0.0
    %418 = vmatpush1.msra.mxu0 0.0
    %419 = vmatprep.subr.mxu0 0.0
    %420 = vmatpush1.msra.mxu0 0.0
    %421 = vmatprep.subr.mxu0 0.0
    %422 = vmatpush1.msra.mxu0 0.0
    %423 = vmatprep.subr.mxu0 0.0
    %424 = vmatpush1.msra.mxu0 0.0
    %425 = vmatprep.subr.mxu0 0.0
    %426 = vmatpush1.msra.mxu0 0.0
    %427 = vmatprep.subr.mxu0 0.0
    %428 = vmatpush1.msra.mxu0 0.0
    %429 = vmatprep.subr.mxu0 0.0
    %430 = vmatpush1.msra.mxu0 0.0
    %431 = vmatprep.subr.mxu0 0.0
    %432 = vmatpush1.msra.mxu0 0.0
    %433 = vmatprep.subr.mxu0 0.0
    %434 = vmatpush1.msra.mxu0 0.0
    %435 = vmatprep.subr.mxu0 0.0
    %436 = vmatpush1.msra.mxu0 0.0
    %437 = vmatprep.subr.mxu0 0.0
    %438 = vmatpush1.msra.mxu0 0.0
    %439 = vmatprep.subr.mxu0 0.0
    %440 = vmatpush1.msra.mxu0 0.0
    %441 = vmatprep.subr.mxu0 0.0
    %442 = vmatpush1.msra.mxu0 0.0
    %443 = vmatprep.subr.mxu0 0.0
    %444 = vmatpush1.msra.mxu0 0.0
    %445 = vmatprep.subr.mxu0 0.0
    %446 = vmatpush1.msra.mxu0 0.0
    %447 = vmatprep.subr.mxu0 0.0
    %448 = vmatpush1.msra.mxu0 0.0
    %449 = vmatprep.subr.mxu0 0.0
    %450 = vmatpush1.msra.mxu0 0.0
    %451 = vmatprep.subr.mxu0 0.0
    %452 = vmatpush1.msra.mxu0 0.0
    %453 = vmatprep.subr.mxu0 0.0
    %454 = vmatpush1.msra.mxu0 0.0
    %455 = vmatprep.subr.mxu0 0.0
    %456 = vmatpush1.msra.mxu0 0.0
    %457 = vmatprep.subr.mxu0 0.0
    %458 = vmatpush1.msra.mxu0 0.0
    %459 = vmatprep.subr.mxu0 0.0
    %460 = vmatpush1.msra.mxu0 0.0
    %461 = vmatprep.subr.mxu0 0.0
    %462 = vmatpush1.msra.mxu0 0.0
    %463 = vmatprep.subr.mxu0 0.0
    %464 = vmatpush1.msra.mxu0 0.0
    %465 = vmatprep.mubr.f32.mxu0 0.0
    %466 = vmatmul.mubr.f32.gmra.mrb[0].mxu0 %v399
    %v467 = vpop.f32.mrb[0].mxu0
    %v468 = vadd.f32 %v396, %v467
    %v469 = vpop.f32.mrb[0].mxu0
    %470 = vdwg.mxu0
    %v471 = vsub.f32 2.0, %v468
    %v472 = vmax.f32 %v471, 0.0
    %v473 = vand.u32 2147483647, %v471
    %v474 = vsub.f32 0.0, %v473
    %v475 = vmul.f32 %v474, 1.442695
    %v476 = vpow.pop %v475
    %v477 = vadd.f32 %v476, 1.0
    %v478 = vlog2.pop %v477
    %v479 = vmul.f32 %v478, 0.6931472
    %v480 = vadd.f32 %v472, %v479
    %v481 = vsub.f32 2.0, %v480
    %v482 = vsub.f32 %v481, -10.0
    %v483 = vmax.f32 %v482, 0.0
    %v484 = vand.u32 2147483647, %v482
    %v485 = vsub.f32 0.0, %v484
    %v486 = vmul.f32 %v485, 1.442695
    %v487 = vpow.pop %v486
    %v488 = vadd.f32 %v487, 1.0
    %v489 = vlog2.pop %v488
    %v490 = vmul.f32 %v489, 0.6931472
    %v491 = vadd.f32 %v483, %v490
    %v492 = vadd.f32 %v491, -10.0
    %v493 = vmul.f32 %v492, 1.442695
    %v494 = vpow.pop %v493
    %s495 = scalar_lea.vmem %s7, 8
    %v496 = vld [vmem:[%s495] sm:$0xff]
    %498 = vrot.lane.b32.xlu0 %v496, 33
    %v499 = vpop.permute.xlu0 %498
    %v501 = vmul.f32 %v494, %v499
    %503 = vrot.lane.b32.xlu0 %v501, 95
    %v504 = vpop.permute.xlu0 %503
    %v506 = vadd.f32 %v468, %v504
    %v507 = vadd.f32 %v62, %v506
    %v508 = vadd.f32 %v277, %v507
    %vm509 = vcmp.eq.s32.totalorder %v63, 1
    %v510 = vsel %vm509, 1, 0
    %511 = vset.pattern.permute.xlu0 0
    %512 = vperm.xlu0 %511, %v510
    %v513 = vpop.permute.xlu0 %512
    %vm514 = vcmp.eq.s32.totalorder %v513, 1
    %v515 = vsel %vm514, %v507, %v284
    %v516 = vmul.f32 %v494, %v494
    %518 = vrot.lane.b32.xlu0 %v516, 95
    %v519 = vpop.permute.xlu0 %518
    %v521 = vsel %vm290, %v519, 0.0
    %522 = vadd.xlane.f32.xlu0 %v521
    %v523 = vpop.xlane.xlu0 %522
    %v524 = vmax.f32 %v294, %v523
    %s525 = scalar_lea.vmem [#allocation2], 96
    %v526 = vld [vmem:[%s525] sm:$0xff]
    %v527 = vld [vmem:[%s525 + $0x8] sm:$0xff]
    %v528 = vld [vmem:[%s525 + $0x10] sm:$0xff]
    %v529 = vld [vmem:[%s525 + $0x18] sm:$0xff]
    %v530 = vld [vmem:[%s525 + $0x20] sm:$0xff]
    %v531 = vld [vmem:[%s525 + $0x28] sm:$0xff]
    %s532 = scalar_lea.vmem %s4, 2
    %v533 = vld [vmem:[%s532] sm:$0x1]
    %v535 = vlaneseq
    %v536 = vshrl.u32 %v535, 7
    %v537 = vsub.s32 0, %v536
    %v538 = vrot.slane %v533, %v537
    %540 = vmatprep.subr.mxu0 0.0
    %541 = vmatpush1.msra.mxu0 %v526
    %542 = vmatprep.subr.mxu0 0.0
    %543 = vmatpush1.msra.mxu0 %v527
    %544 = vmatprep.subr.mxu0 0.0
    %545 = vmatpush1.msra.mxu0 %v528
    %546 = vmatprep.subr.mxu0 0.0
    %547 = vmatpush1.msra.mxu0 %v529
    %548 = vmatprep.subr.mxu0 0.0
    %549 = vmatpush1.msra.mxu0 %v530
    %550 = vmatprep.subr.mxu0 0.0
    %551 = vmatpush1.msra.mxu0 %v531
    %552 = vmatprep.subr.mxu0 0.0
    %553 = vmatpush1.msra.mxu0 0.0
    %554 = vmatprep.subr.mxu0 0.0
    %555 = vmatpush1.msra.mxu0 0.0
    %556 = vmatprep.subr.mxu0 0.0
    %557 = vmatpush1.msra.mxu0 0.0
    %558 = vmatprep.subr.mxu0 0.0
    %559 = vmatpush1.msra.mxu0 0.0
    %560 = vmatprep.subr.mxu0 0.0
    %561 = vmatpush1.msra.mxu0 0.0
    %562 = vmatprep.subr.mxu0 0.0
    %563 = vmatpush1.msra.mxu0 0.0
    %564 = vmatprep.subr.mxu0 0.0
    %565 = vmatpush1.msra.mxu0 0.0
    %566 = vmatprep.subr.mxu0 0.0
    %567 = vmatpush1.msra.mxu0 0.0
    %568 = vmatprep.subr.mxu0 0.0
    %569 = vmatpush1.msra.mxu0 0.0
    %570 = vmatprep.subr.mxu0 0.0
    %571 = vmatpush1.msra.mxu0 0.0
    %572 = vmatprep.subr.mxu0 0.0
    %573 = vmatpush1.msra.mxu0 0.0
    %574 = vmatprep.subr.mxu0 0.0
    %575 = vmatpush1.msra.mxu0 0.0
    %576 = vmatprep.subr.mxu0 0.0
    %577 = vmatpush1.msra.mxu0 0.0
    %578 = vmatprep.subr.mxu0 0.0
    %579 = vmatpush1.msra.mxu0 0.0
    %580 = vmatprep.subr.mxu0 0.0
    %581 = vmatpush1.msra.mxu0 0.0
    %582 = vmatprep.subr.mxu0 0.0
    %583 = vmatpush1.msra.mxu0 0.0
    %584 = vmatprep.subr.mxu0 0.0
    %585 = vmatpush1.msra.mxu0 0.0
    %586 = vmatprep.subr.mxu0 0.0
    %587 = vmatpush1.msra.mxu0 0.0
    %588 = vmatprep.subr.mxu0 0.0
    %589 = vmatpush1.msra.mxu0 0.0
    %590 = vmatprep.subr.mxu0 0.0
    %591 = vmatpush1.msra.mxu0 0.0
    %592 = vmatprep.subr.mxu0 0.0
    %593 = vmatpush1.msra.mxu0 0.0
    %594 = vmatprep.subr.mxu0 0.0
    %595 = vmatpush1.msra.mxu0 0.0
    %596 = vmatprep.subr.mxu0 0.0
    %597 = vmatpush1.msra.mxu0 0.0
    %598 = vmatprep.subr.mxu0 0.0
    %599 = vmatpush1.msra.mxu0 0.0
    %600 = vmatprep.subr.mxu0 0.0
    %601 = vmatpush1.msra.mxu0 0.0
    %602 = vmatprep.subr.mxu0 0.0
    %603 = vmatpush1.msra.mxu0 0.0
    %604 = vmatprep.mubr.f32.mxu0 0.0
    %605 = vmatmul.mubr.f32.gmra.mrb[0].mxu0 %v79
    %v606 = vpop.f32.mrb[0].mxu0
    %v607 = vadd.f32 %v538, %v606
    %v608 = vpop.f32.mrb[0].mxu0
    %609 = vdwg.mxu0
    %v610 = vmax.f32 %v607, 0.0
    %s611 = scalar_lea.vmem [#allocation5], 128
    %v612 = vld [vmem:[%s611] sm:$0xff]
    %v613 = vld [vmem:[%s611 + $0x8] sm:$0xff]
    %v614 = vld [vmem:[%s611 + $0x10] sm:$0xff]
    %v615 = vld [vmem:[%s611 + $0x18] sm:$0xff]
    %v616 = vld [vmem:[%s611 + $0x20] sm:$0xff]
    %v617 = vld [vmem:[%s611 + $0x28] sm:$0xff]
    %v618 = vld [vmem:[%s611 + $0x30] sm:$0xff]
    %v619 = vld [vmem:[%s611 + $0x38] sm:$0xff]
    %s620 = scalar_lea.vmem %s6, 2
    %v621 = vld [vmem:[%s620] sm:$0x1]
    %v623 = vlaneseq
    %v624 = vshrl.u32 %v623, 7
    %v625 = vsub.s32 0, %v624
    %v626 = vrot.slane %v621, %v625
    %v629 = vsel %vm167, %v610, 0
    %631 = vmatprep.subr.mxu0 0.0
    %632 = vmatpush1.msra.mxu0 %v612
    %633 = vmatprep.subr.mxu0 0.0
    %634 = vmatpush1.msra.mxu0 %v613
    %635 = vmatprep.subr.mxu0 0.0
    %636 = vmatpush1.msra.mxu0 %v614
    %637 = vmatprep.subr.mxu0 0.0
    %638 = vmatpush1.msra.mxu0 %v615
    %639 = vmatprep.subr.mxu0 0.0
    %640 = vmatpush1.msra.mxu0 %v616
    %641 = vmatprep.subr.mxu0 0.0
    %642 = vmatpush1.msra.mxu0 %v617
    %643 = vmatprep.subr.mxu0 0.0
    %644 = vmatpush1.msra.mxu0 %v618
    %645 = vmatprep.subr.mxu0 0.0
    %646 = vmatpush1.msra.mxu0 %v619
    %647 = vmatprep.subr.mxu0 0.0
    %648 = vmatpush1.msra.mxu0 0.0
    %649 = vmatprep.subr.mxu0 0.0
    %650 = vmatpush1.msra.mxu0 0.0
    %651 = vmatprep.subr.mxu0 0.0
    %652 = vmatpush1.msra.mxu0 0.0
    %653 = vmatprep.subr.mxu0 0.0
    %654 = vmatpush1.msra.mxu0 0.0
    %655 = vmatprep.subr.mxu0 0.0
    %656 = vmatpush1.msra.mxu0 0.0
    %657 = vmatprep.subr.mxu0 0.0
    %658 = vmatpush1.msra.mxu0 0.0
    %659 = vmatprep.subr.mxu0 0.0
    %660 = vmatpush1.msra.mxu0 0.0
    %661 = vmatprep.subr.mxu0 0.0
    %662 = vmatpush1.msra.mxu0 0.0
    %663 = vmatprep.subr.mxu0 0.0
    %664 = vmatpush1.msra.mxu0 0.0
    %665 = vmatprep.subr.mxu0 0.0
    %666 = vmatpush1.msra.mxu0 0.0
    %667 = vmatprep.subr.mxu0 0.0
    %668 = vmatpush1.msra.mxu0 0.0
    %669 = vmatprep.subr.mxu0 0.0
    %670 = vmatpush1.msra.mxu0 0.0
    %671 = vmatprep.subr.mxu0 0.0
    %672 = vmatpush1.msra.mxu0 0.0
    %673 = vmatprep.subr.mxu0 0.0
    %674 = vmatpush1.msra.mxu0 0.0
    %675 = vmatprep.subr.mxu0 0.0
    %676 = vmatpush1.msra.mxu0 0.0
    %677 = vmatprep.subr.mxu0 0.0
    %678 = vmatpush1.msra.mxu0 0.0
    %679 = vmatprep.subr.mxu0 0.0
    %680 = vmatpush1.msra.mxu0 0.0
    %681 = vmatprep.subr.mxu0 0.0
    %682 = vmatpush1.msra.mxu0 0.0
    %683 = vmatprep.subr.mxu0 0.0
    %684 = vmatpush1.msra.mxu0 0.0
    %685 = vmatprep.subr.mxu0 0.0
    %686 = vmatpush1.msra.mxu0 0.0
    %687 = vmatprep.subr.mxu0 0.0
    %688 = vmatpush1.msra.mxu0 0.0
    %689 = vmatprep.subr.mxu0 0.0
    %690 = vmatpush1.msra.mxu0 0.0
    %691 = vmatprep.subr.mxu0 0.0
    %692 = vmatpush1.msra.mxu0 0.0
    %693 = vmatprep.subr.mxu0 0.0
    %694 = vmatpush1.msra.mxu0 0.0
    %695 = vmatprep.mubr.f32.mxu0 0.0
    %696 = vmatmul.mubr.f32.gmra.mrb[0].mxu0 %v629
    %v697 = vpop.f32.mrb[0].mxu0
    %v698 = vadd.f32 %v626, %v697
    %v699 = vpop.f32.mrb[0].mxu0
    %700 = vdwg.mxu0
    %v701 = vsub.f32 2.0, %v698
    %v702 = vmax.f32 %v701, 0.0
    %v703 = vand.u32 2147483647, %v701
    %v704 = vsub.f32 0.0, %v703
    %v705 = vmul.f32 %v704, 1.442695
    %v706 = vpow.pop %v705
    %v707 = vadd.f32 %v706, 1.0
    %v708 = vlog2.pop %v707
    %v709 = vmul.f32 %v708, 0.6931472
    %v710 = vadd.f32 %v702, %v709
    %v711 = vsub.f32 2.0, %v710
    %v712 = vsub.f32 %v711, -10.0
    %v713 = vmax.f32 %v712, 0.0
    %v714 = vand.u32 2147483647, %v712
    %v715 = vsub.f32 0.0, %v714
    %v716 = vmul.f32 %v715, 1.442695
    %v717 = vpow.pop %v716
    %v718 = vadd.f32 %v717, 1.0
    %v719 = vlog2.pop %v718
    %v720 = vmul.f32 %v719, 0.6931472
    %v721 = vadd.f32 %v713, %v720
    %v722 = vadd.f32 %v721, -10.0
    %v723 = vmul.f32 %v722, 1.442695
    %v724 = vpow.pop %v723
    %s725 = scalar_lea.vmem %s7, 16
    %v726 = vld [vmem:[%s725] sm:$0xff]
    %728 = vrot.lane.b32.xlu0 %v726, 33
    %v729 = vpop.permute.xlu0 %728
    %v731 = vmul.f32 %v724, %v729
    %733 = vrot.lane.b32.xlu0 %v731, 95
    %v734 = vpop.permute.xlu0 %733
    %v736 = vadd.f32 %v698, %v734
    %v737 = vadd.f32 %v62, %v736
    %v738 = vadd.f32 %v508, %v737
    %vm739 = vcmp.eq.s32.totalorder %v63, 2
    %v740 = vsel %vm739, 1, 0
    %741 = vset.pattern.permute.xlu0 0
    %742 = vperm.xlu0 %741, %v740
    %v743 = vpop.permute.xlu0 %742
    %vm744 = vcmp.eq.s32.totalorder %v743, 1
    %v745 = vsel %vm744, %v737, %v515
    %v746 = vmul.f32 %v724, %v724
    %748 = vrot.lane.b32.xlu0 %v746, 95
    %v749 = vpop.permute.xlu0 %748
    %v751 = vsel %vm290, %v749, 0.0
    %752 = vadd.xlane.f32.xlu0 %v751
    %v753 = vpop.xlane.xlu0 %752
    %v754 = vmax.f32 %v524, %v753
    %s755 = scalar_lea.vmem [#allocation2], 144
    %v756 = vld [vmem:[%s755] sm:$0xff]
    %v757 = vld [vmem:[%s755 + $0x8] sm:$0xff]
    %v758 = vld [vmem:[%s755 + $0x10] sm:$0xff]
    %v759 = vld [vmem:[%s755 + $0x18] sm:$0xff]
    %v760 = vld [vmem:[%s755 + $0x20] sm:$0xff]
    %v761 = vld [vmem:[%s755 + $0x28] sm:$0xff]
    %s762 = scalar_lea.vmem %s4, 3
    %v763 = vld [vmem:[%s762] sm:$0x1]
    %v765 = vlaneseq
    %v766 = vshrl.u32 %v765, 7
    %v767 = vsub.s32 0, %v766
    %v768 = vrot.slane %v763, %v767
    %770 = vmatprep.subr.mxu0 0.0
    %771 = vmatpush1.msra.mxu0 %v756
    %772 = vmatprep.subr.mxu0 0.0
    %773 = vmatpush1.msra.mxu0 %v757
    %774 = vmatprep.subr.mxu0 0.0
    %775 = vmatpush1.msra.mxu0 %v758
    %776 = vmatprep.subr.mxu0 0.0
    %777 = vmatpush1.msra.mxu0 %v759
    %778 = vmatprep.subr.mxu0 0.0
    %779 = vmatpush1.msra.mxu0 %v760
    %780 = vmatprep.subr.mxu0 0.0
    %781 = vmatpush1.msra.mxu0 %v761
    %782 = vmatprep.subr.mxu0 0.0
    %783 = vmatpush1.msra.mxu0 0.0
    %784 = vmatprep.subr.mxu0 0.0
    %785 = vmatpush1.msra.mxu0 0.0
    %786 = vmatprep.subr.mxu0 0.0
    %787 = vmatpush1.msra.mxu0 0.0
    %788 = vmatprep.subr.mxu0 0.0
    %789 = vmatpush1.msra.mxu0 0.0
    %790 = vmatprep.subr.mxu0 0.0
    %791 = vmatpush1.msra.mxu0 0.0
    %792 = vmatprep.subr.mxu0 0.0
    %793 = vmatpush1.msra.mxu0 0.0
    %794 = vmatprep.subr.mxu0 0.0
    %795 = vmatpush1.msra.mxu0 0.0
    %796 = vmatprep.subr.mxu0 0.0
    %797 = vmatpush1.msra.mxu0 0.0
    %798 = vmatprep.subr.mxu0 0.0
    %799 = vmatpush1.msra.mxu0 0.0
    %800 = vmatprep.subr.mxu0 0.0
    %801 = vmatpush1.msra.mxu0 0.0
    %802 = vmatprep.subr.mxu0 0.0
    %803 = vmatpush1.msra.mxu0 0.0
    %804 = vmatprep.subr.mxu0 0.0
    %805 = vmatpush1.msra.mxu0 0.0
    %806 = vmatprep.subr.mxu0 0.0
    %807 = vmatpush1.msra.mxu0 0.0
    %808 = vmatprep.subr.mxu0 0.0
    %809 = vmatpush1.msra.mxu0 0.0
    %810 = vmatprep.subr.mxu0 0.0
    %811 = vmatpush1.msra.mxu0 0.0
    %812 = vmatprep.subr.mxu0 0.0
    %813 = vmatpush1.msra.mxu0 0.0
    %814 = vmatprep.subr.mxu0 0.0
    %815 = vmatpush1.msra.mxu0 0.0
    %816 = vmatprep.subr.mxu0 0.0
    %817 = vmatpush1.msra.mxu0 0.0
    %818 = vmatprep.subr.mxu0 0.0
    %819 = vmatpush1.msra.mxu0 0.0
    %820 = vmatprep.subr.mxu0 0.0
    %821 = vmatpush1.msra.mxu0 0.0
    %822 = vmatprep.subr.mxu0 0.0
    %823 = vmatpush1.msra.mxu0 0.0
    %824 = vmatprep.subr.mxu0 0.0
    %825 = vmatpush1.msra.mxu0 0.0
    %826 = vmatprep.subr.mxu0 0.0
    %827 = vmatpush1.msra.mxu0 0.0
    %828 = vmatprep.subr.mxu0 0.0
    %829 = vmatpush1.msra.mxu0 0.0
    %830 = vmatprep.subr.mxu0 0.0
    %831 = vmatpush1.msra.mxu0 0.0
    %832 = vmatprep.subr.mxu0 0.0
    %833 = vmatpush1.msra.mxu0 0.0
    %834 = vmatprep.mubr.f32.mxu0 0.0
    %835 = vmatmul.mubr.f32.gmra.mrb[0].mxu0 %v79
    %v836 = vpop.f32.mrb[0].mxu0
    %v837 = vadd.f32 %v768, %v836
    %v838 = vpop.f32.mrb[0].mxu0
    %839 = vdwg.mxu0
    %v840 = vmax.f32 %v837, 0.0
    %s841 = scalar_lea.vmem [#allocation5], 192
    %v842 = vld [vmem:[%s841] sm:$0xff]
    %v843 = vld [vmem:[%s841 + $0x8] sm:$0xff]
    %v844 = vld [vmem:[%s841 + $0x10] sm:$0xff]
    %v845 = vld [vmem:[%s841 + $0x18] sm:$0xff]
    %v846 = vld [vmem:[%s841 + $0x20] sm:$0xff]
    %v847 = vld [vmem:[%s841 + $0x28] sm:$0xff]
    %v848 = vld [vmem:[%s841 + $0x30] sm:$0xff]
    %v849 = vld [vmem:[%s841 + $0x38] sm:$0xff]
    %s850 = scalar_lea.vmem %s6, 3
    %v851 = vld [vmem:[%s850] sm:$0x1]
    %v853 = vlaneseq
    %v854 = vshrl.u32 %v853, 7
    %v855 = vsub.s32 0, %v854
    %v856 = vrot.slane %v851, %v855
    %v859 = vsel %vm167, %v840, 0
    %861 = vmatprep.subr.mxu0 0.0
    %862 = vmatpush1.msra.mxu0 %v842
    %863 = vmatprep.subr.mxu0 0.0
    %864 = vmatpush1.msra.mxu0 %v843
    %865 = vmatprep.subr.mxu0 0.0
    %866 = vmatpush1.msra.mxu0 %v844
    %867 = vmatprep.subr.mxu0 0.0
    %868 = vmatpush1.msra.mxu0 %v845
    %869 = vmatprep.subr.mxu0 0.0
    %870 = vmatpush1.msra.mxu0 %v846
    %871 = vmatprep.subr.mxu0 0.0
    %872 = vmatpush1.msra.mxu0 %v847
    %873 = vmatprep.subr.mxu0 0.0
    %874 = vmatpush1.msra.mxu0 %v848
    %875 = vmatprep.subr.mxu0 0.0
    %876 = vmatpush1.msra.mxu0 %v849
    %877 = vmatprep.subr.mxu0 0.0
    %878 = vmatpush1.msra.mxu0 0.0
    %879 = vmatprep.subr.mxu0 0.0
    %880 = vmatpush1.msra.mxu0 0.0
    %881 = vmatprep.subr.mxu0 0.0
    %882 = vmatpush1.msra.mxu0 0.0
    %883 = vmatprep.subr.mxu0 0.0
    %884 = vmatpush1.msra.mxu0 0.0
    %885 = vmatprep.subr.mxu0 0.0
    %886 = vmatpush1.msra.mxu0 0.0
    %887 = vmatprep.subr.mxu0 0.0
    %888 = vmatpush1.msra.mxu0 0.0
    %889 = vmatprep.subr.mxu0 0.0
    %890 = vmatpush1.msra.mxu0 0.0
    %891 = vmatprep.subr.mxu0 0.0
    %892 = vmatpush1.msra.mxu0 0.0
    %893 = vmatprep.subr.mxu0 0.0
    %894 = vmatpush1.msra.mxu0 0.0
    %895 = vmatprep.subr.mxu0 0.0
    %896 = vmatpush1.msra.mxu0 0.0
    %897 = vmatprep.subr.mxu0 0.0
    %898 = vmatpush1.msra.mxu0 0.0
    %899 = vmatprep.subr.mxu0 0.0
    %900 = vmatpush1.msra.mxu0 0.0
    %901 = vmatprep.subr.mxu0 0.0
    %902 = vmatpush1.msra.mxu0 0.0
    %903 = vmatprep.subr.mxu0 0.0
    %904 = vmatpush1.msra.mxu0 0.0
    %905 = vmatprep.subr.mxu0 0.0
    %906 = vmatpush1.msra.mxu0 0.0
    %907 = vmatprep.subr.mxu0 0.0
    %908 = vmatpush1.msra.mxu0 0.0
    %909 = vmatprep.subr.mxu0 0.0
    %910 = vmatpush1.msra.mxu0 0.0
    %911 = vmatprep.subr.mxu0 0.0
    %912 = vmatpush1.msra.mxu0 0.0
    %913 = vmatprep.subr.mxu0 0.0
    %914 = vmatpush1.msra.mxu0 0.0
    %915 = vmatprep.subr.mxu0 0.0
    %916 = vmatpush1.msra.mxu0 0.0
    %917 = vmatprep.subr.mxu0 0.0
    %918 = vmatpush1.msra.mxu0 0.0
    %919 = vmatprep.subr.mxu0 0.0
    %920 = vmatpush1.msra.mxu0 0.0
    %921 = vmatprep.subr.mxu0 0.0
    %922 = vmatpush1.msra.mxu0 0.0
    %923 = vmatprep.subr.mxu0 0.0
    %924 = vmatpush1.msra.mxu0 0.0
    %925 = vmatprep.mubr.f32.mxu0 0.0
    %926 = vmatmul.mubr.f32.gmra.mrb[0].mxu0 %v859
    %v927 = vpop.f32.mrb[0].mxu0
    %v928 = vadd.f32 %v856, %v927
    %v929 = vpop.f32.mrb[0].mxu0
    %930 = vdwg.mxu0
    %v931 = vsub.f32 2.0, %v928
    %v932 = vmax.f32 %v931, 0.0
    %v933 = vand.u32 2147483647, %v931
    %v934 = vsub.f32 0.0, %v933
    %v935 = vmul.f32 %v934, 1.442695
    %v936 = vpow.pop %v935
    %v937 = vadd.f32 %v936, 1.0
    %v938 = vlog2.pop %v937
    %v939 = vmul.f32 %v938, 0.6931472
    %v940 = vadd.f32 %v932, %v939
    %v941 = vsub.f32 2.0, %v940
    %v942 = vsub.f32 %v941, -10.0
    %v943 = vmax.f32 %v942, 0.0
    %v944 = vand.u32 2147483647, %v942
    %v945 = vsub.f32 0.0, %v944
    %v946 = vmul.f32 %v945, 1.442695
    %v947 = vpow.pop %v946
    %v948 = vadd.f32 %v947, 1.0
    %v949 = vlog2.pop %v948
    %v950 = vmul.f32 %v949, 0.6931472
    %v951 = vadd.f32 %v943, %v950
    %v952 = vadd.f32 %v951, -10.0
    %v953 = vmul.f32 %v952, 1.442695
    %v954 = vpow.pop %v953
    %s955 = scalar_lea.vmem %s7, 24
    %v956 = vld [vmem:[%s955] sm:$0xff]
    %958 = vrot.lane.b32.xlu0 %v956, 33
    %v959 = vpop.permute.xlu0 %958
    %v961 = vmul.f32 %v954, %v959
    %963 = vrot.lane.b32.xlu0 %v961, 95
    %v964 = vpop.permute.xlu0 %963
    %v966 = vadd.f32 %v928, %v964
    %v967 = vadd.f32 %v62, %v966
    %v968 = vadd.f32 %v738, %v967
    %vm969 = vcmp.eq.s32.totalorder %v63, 3
    %v970 = vsel %vm969, 1, 0
    %971 = vset.pattern.permute.xlu0 0
    %972 = vperm.xlu0 %971, %v970
    %v973 = vpop.permute.xlu0 %972
    %vm974 = vcmp.eq.s32.totalorder %v973, 1
    %v975 = vsel %vm974, %v967, %v745
    %v976 = vmul.f32 %v954, %v954
    %978 = vrot.lane.b32.xlu0 %v976, 95
    %v979 = vpop.permute.xlu0 %978
    %v981 = vsel %vm290, %v979, 0.0
    %982 = vadd.xlane.f32.xlu0 %v981
    %v983 = vpop.xlane.xlu0 %982
    %v984 = vmax.f32 %v754, %v983
    %s985 = scalar_lea.vmem [#allocation2], 192
    %v986 = vld [vmem:[%s985] sm:$0xff]
    %v987 = vld [vmem:[%s985 + $0x8] sm:$0xff]
    %v988 = vld [vmem:[%s985 + $0x10] sm:$0xff]
    %v989 = vld [vmem:[%s985 + $0x18] sm:$0xff]
    %v990 = vld [vmem:[%s985 + $0x20] sm:$0xff]
    %v991 = vld [vmem:[%s985 + $0x28] sm:$0xff]
    %s992 = scalar_lea.vmem %s4, 4
    %v993 = vld [vmem:[%s992] sm:$0x1]
    %v995 = vlaneseq
    %v996 = vshrl.u32 %v995, 7
    %v997 = vsub.s32 0, %v996
    %v998 = vrot.slane %v993, %v997
    %1000 = vmatprep.subr.mxu0 0.0
    %1001 = vmatpush1.msra.mxu0 %v986
    %1002 = vmatprep.subr.mxu0 0.0
    %1003 = vmatpush1.msra.mxu0 %v987
    %1004 = vmatprep.subr.mxu0 0.0
    %1005 = vmatpush1.msra.mxu0 %v988
    %1006 = vmatprep.subr.mxu0 0.0
    %1007 = vmatpush1.msra.mxu0 %v989
    %1008 = vmatprep.subr.mxu0 0.0
    %1009 = vmatpush1.msra.mxu0 %v990
    %1010 = vmatprep.subr.mxu0 0.0
    %1011 = vmatpush1.msra.mxu0 %v991
    %1012 = vmatprep.subr.mxu0 0.0
    %1013 = vmatpush1.msra.mxu0 0.0
    %1014 = vmatprep.subr.mxu0 0.0
    %1015 = vmatpush1.msra.mxu0 0.0
    %1016 = vmatprep.subr.mxu0 0.0
    %1017 = vmatpush1.msra.mxu0 0.0
    %1018 = vmatprep.subr.mxu0 0.0
    %1019 = vmatpush1.msra.mxu0 0.0
    %1020 = vmatprep.subr.mxu0 0.0
    %1021 = vmatpush1.msra.mxu0 0.0
    %1022 = vmatprep.subr.mxu0 0.0
    %1023 = vmatpush1.msra.mxu0 0.0
    %1024 = vmatprep.subr.mxu0 0.0
    %1025 = vmatpush1.msra.mxu0 0.0
    %1026 = vmatprep.subr.mxu0 0.0
    %1027 = vmatpush1.msra.mxu0 0.0
    %1028 = vmatprep.subr.mxu0 0.0
    %1029 = vmatpush1.msra.mxu0 0.0
    %1030 = vmatprep.subr.mxu0 0.0
    %1031 = vmatpush1.msra.mxu0 0.0
    %1032 = vmatprep.subr.mxu0 0.0
    %1033 = vmatpush1.msra.mxu0 0.0
    %1034 = vmatprep.subr.mxu0 0.0
    %1035 = vmatpush1.msra.mxu0 0.0
    %1036 = vmatprep.subr.mxu0 0.0
    %1037 = vmatpush1.msra.mxu0 0.0
    %1038 = vmatprep.subr.mxu0 0.0
    %1039 = vmatpush1.msra.mxu0 0.0
    %1040 = vmatprep.subr.mxu0 0.0
    %1041 = vmatpush1.msra.mxu0 0.0
    %1042 = vmatprep.subr.mxu0 0.0
    %1043 = vmatpush1.msra.mxu0 0.0
    %1044 = vmatprep.subr.mxu0 0.0
    %1045 = vmatpush1.msra.mxu0 0.0
    %1046 = vmatprep.subr.mxu0 0.0
    %1047 = vmatpush1.msra.mxu0 0.0
    %1048 = vmatprep.subr.mxu0 0.0
    %1049 = vmatpush1.msra.mxu0 0.0
    %1050 = vmatprep.subr.mxu0 0.0
    %1051 = vmatpush1.msra.mxu0 0.0
    %1052 = vmatprep.subr.mxu0 0.0
    %1053 = vmatpush1.msra.mxu0 0.0
    %1054 = vmatprep.subr.mxu0 0.0
    %1055 = vmatpush1.msra.mxu0 0.0
    %1056 = vmatprep.subr.mxu0 0.0
    %1057 = vmatpush1.msra.mxu0 0.0
    %1058 = vmatprep.subr.mxu0 0.0
    %1059 = vmatpush1.msra.mxu0 0.0
    %1060 = vmatprep.subr.mxu0 0.0
    %1061 = vmatpush1.msra.mxu0 0.0
    %1062 = vmatprep.subr.mxu0 0.0
    %1063 = vmatpush1.msra.mxu0 0.0
    %1064 = vmatprep.mubr.f32.mxu0 0.0
    %1065 = vmatmul.mubr.f32.gmra.mrb[0].mxu0 %v79
    %v1066 = vpop.f32.mrb[0].mxu0
    %v1067 = vadd.f32 %v998, %v1066
    %v1068 = vpop.f32.mrb[0].mxu0
    %1069 = vdwg.mxu0
    %v1070 = vmax.f32 %v1067, 0.0
    %s1071 = scalar_lea.vmem [#allocation5], 256
    %v1072 = vld [vmem:[%s1071] sm:$0xff]
    %v1073 = vld [vmem:[%s1071 + $0x8] sm:$0xff]
    %v1074 = vld [vmem:[%s1071 + $0x10] sm:$0xff]
    %v1075 = vld [vmem:[%s1071 + $0x18] sm:$0xff]
    %v1076 = vld [vmem:[%s1071 + $0x20] sm:$0xff]
    %v1077 = vld [vmem:[%s1071 + $0x28] sm:$0xff]
    %v1078 = vld [vmem:[%s1071 + $0x30] sm:$0xff]
    %v1079 = vld [vmem:[%s1071 + $0x38] sm:$0xff]
    %s1080 = scalar_lea.vmem %s6, 4
    %v1081 = vld [vmem:[%s1080] sm:$0x1]
    %v1083 = vlaneseq
    %v1084 = vshrl.u32 %v1083, 7
    %v1085 = vsub.s32 0, %v1084
    %v1086 = vrot.slane %v1081, %v1085
    %v1089 = vsel %vm167, %v1070, 0
    %1091 = vmatprep.subr.mxu0 0.0
    %1092 = vmatpush1.msra.mxu0 %v1072
    %1093 = vmatprep.subr.mxu0 0.0
    %1094 = vmatpush1.msra.mxu0 %v1073
    %1095 = vmatprep.subr.mxu0 0.0
    %1096 = vmatpush1.msra.mxu0 %v1074
    %1097 = vmatprep.subr.mxu0 0.0
    %1098 = vmatpush1.msra.mxu0 %v1075
    %1099 = vmatprep.subr.mxu0 0.0
    %1100 = vmatpush1.msra.mxu0 %v1076
    %1101 = vmatprep.subr.mxu0 0.0
    %1102 = vmatpush1.msra.mxu0 %v1077
    %1103 = vmatprep.subr.mxu0 0.0
    %1104 = vmatpush1.msra.mxu0 %v1078
    %1105 = vmatprep.subr.mxu0 0.0
    %1106 = vmatpush1.msra.mxu0 %v1079
    %1107 = vmatprep.subr.mxu0 0.0
    %1108 = vmatpush1.msra.mxu0 0.0
    %1109 = vmatprep.subr.mxu0 0.0
    %1110 = vmatpush1.msra.mxu0 0.0
    %1111 = vmatprep.subr.mxu0 0.0
    %1112 = vmatpush1.msra.mxu0 0.0
    %1113 = vmatprep.subr.mxu0 0.0
    %1114 = vmatpush1.msra.mxu0 0.0
    %1115 = vmatprep.subr.mxu0 0.0
    %1116 = vmatpush1.msra.mxu0 0.0
    %1117 = vmatprep.subr.mxu0 0.0
    %1118 = vmatpush1.msra.mxu0 0.0
    %1119 = vmatprep.subr.mxu0 0.0
    %1120 = vmatpush1.msra.mxu0 0.0
    %1121 = vmatprep.subr.mxu0 0.0
    %1122 = vmatpush1.msra.mxu0 0.0
    %1123 = vmatprep.subr.mxu0 0.0
    %1124 = vmatpush1.msra.mxu0 0.0
    %1125 = vmatprep.subr.mxu0 0.0
    %1126 = vmatpush1.msra.mxu0 0.0
    %1127 = vmatprep.subr.mxu0 0.0
    %1128 = vmatpush1.msra.mxu0 0.0
    %1129 = vmatprep.subr.mxu0 0.0
    %1130 = vmatpush1.msra.mxu0 0.0
    %1131 = vmatprep.subr.mxu0 0.0
    %1132 = vmatpush1.msra.mxu0 0.0
    %1133 = vmatprep.subr.mxu0 0.0
    %1134 = vmatpush1.msra.mxu0 0.0
    %1135 = vmatprep.subr.mxu0 0.0
    %1136 = vmatpush1.msra.mxu0 0.0
    %1137 = vmatprep.subr.mxu0 0.0
    %1138 = vmatpush1.msra.mxu0 0.0
    %1139 = vmatprep.subr.mxu0 0.0
    %1140 = vmatpush1.msra.mxu0 0.0
    %1141 = vmatprep.subr.mxu0 0.0
    %1142 = vmatpush1.msra.mxu0 0.0
    %1143 = vmatprep.subr.mxu0 0.0
    %1144 = vmatpush1.msra.mxu0 0.0
    %1145 = vmatprep.subr.mxu0 0.0
    %1146 = vmatpush1.msra.mxu0 0.0
    %1147 = vmatprep.subr.mxu0 0.0
    %1148 = vmatpush1.msra.mxu0 0.0
    %1149 = vmatprep.subr.mxu0 0.0
    %1150 = vmatpush1.msra.mxu0 0.0
    %1151 = vmatprep.subr.mxu0 0.0
    %1152 = vmatpush1.msra.mxu0 0.0
    %1153 = vmatprep.subr.mxu0 0.0
    %1154 = vmatpush1.msra.mxu0 0.0
    %1155 = vmatprep.mubr.f32.mxu0 0.0
    %1156 = vmatmul.mubr.f32.gmra.mrb[0].mxu0 %v1089
    %v1157 = vpop.f32.mrb[0].mxu0
    %v1158 = vadd.f32 %v1086, %v1157
    %v1159 = vpop.f32.mrb[0].mxu0
    %1160 = vdwg.mxu0
    %v1161 = vsub.f32 2.0, %v1158
    %v1162 = vmax.f32 %v1161, 0.0
    %v1163 = vand.u32 2147483647, %v1161
    %v1164 = vsub.f32 0.0, %v1163
    %v1165 = vmul.f32 %v1164, 1.442695
    %v1166 = vpow.pop %v1165
    %v1167 = vadd.f32 %v1166, 1.0
    %v1168 = vlog2.pop %v1167
    %v1169 = vmul.f32 %v1168, 0.6931472
    %v1170 = vadd.f32 %v1162, %v1169
    %v1171 = vsub.f32 2.0, %v1170
    %v1172 = vsub.f32 %v1171, -10.0
    %v1173 = vmax.f32 %v1172, 0.0
    %v1174 = vand.u32 2147483647, %v1172
    %v1175 = vsub.f32 0.0, %v1174
    %v1176 = vmul.f32 %v1175, 1.442695
    %v1177 = vpow.pop %v1176
    %v1178 = vadd.f32 %v1177, 1.0
    %v1179 = vlog2.pop %v1178
    %v1180 = vmul.f32 %v1179, 0.6931472
    %v1181 = vadd.f32 %v1173, %v1180
    %v1182 = vadd.f32 %v1181, -10.0
    %v1183 = vmul.f32 %v1182, 1.442695
    %v1184 = vpow.pop %v1183
    %s1185 = scalar_lea.vmem %s7, 32
    %v1186 = vld [vmem:[%s1185] sm:$0xff]
    %1188 = vrot.lane.b32.xlu0 %v1186, 33
    %v1189 = vpop.permute.xlu0 %1188
    %v1191 = vmul.f32 %v1184, %v1189
    %1193 = vrot.lane.b32.xlu0 %v1191, 95
    %v1194 = vpop.permute.xlu0 %1193
    %v1196 = vadd.f32 %v1158, %v1194
    %v1197 = vadd.f32 %v62, %v1196
    %v1198 = vadd.f32 %v968, %v1197
    %vm1199 = vcmp.eq.s32.totalorder %v63, 4
    %v1200 = vsel %vm1199, 1, 0
    %1201 = vset.pattern.permute.xlu0 0
    %1202 = vperm.xlu0 %1201, %v1200
    %v1203 = vpop.permute.xlu0 %1202
    %vm1204 = vcmp.eq.s32.totalorder %v1203, 1
    %v1205 = vsel %vm1204, %v1197, %v975
    %v1206 = vmul.f32 %v1184, %v1184
    %1208 = vrot.lane.b32.xlu0 %v1206, 95
    %v1209 = vpop.permute.xlu0 %1208
    %v1211 = vsel %vm290, %v1209, 0.0
    %1212 = vadd.xlane.f32.xlu0 %v1211
    %v1213 = vpop.xlane.xlu0 %1212
    %v1214 = vmax.f32 %v984, %v1213
    %1215 = vst.msk [vmem:[%s8] sm:$0xff] %vm290, %v1205
    %v1216 = vmul.f32 %v1198, 0.2
    %v1217 = vsub.f32 %v276, %v1216
    %v1218 = vmul.f32 %v1217, %v1217
    %v1219 = vadd.f32 %v1218, 0.0
    %v1220 = vsub.f32 %v507, %v1216
    %v1221 = vmul.f32 %v1220, %v1220
    %v1222 = vadd.f32 %v1219, %v1221
    %v1223 = vsub.f32 %v737, %v1216
    %v1224 = vmul.f32 %v1223, %v1223
    %v1225 = vadd.f32 %v1222, %v1224
    %v1226 = vsub.f32 %v967, %v1216
    %v1227 = vmul.f32 %v1226, %v1226
    %v1228 = vadd.f32 %v1225, %v1227
    %v1229 = vsub.f32 %v1197, %v1216
    %v1230 = vmul.f32 %v1229, %v1229
    %v1231 = vadd.f32 %v1228, %v1230
    %v1232 = vsel %vm290, %v1231, 0.0
    %1233 = vadd.xlane.f32.xlu0 %v1232
    %v1234 = vpop.xlane.xlu0 %1233
    %v1235 = vmul.f32 %v1234, 0.25
    %vm1236 = vcmask 7168
    %1237 = vst.msk [vmem:[%s9] sm:$0xff] %vm1236, %v1235
    %1238 = vst.msk [vmem:[#allocation7] sm:$0xff] %vm1236, %v1214
    // Predicated region
    $region42: #{ensemble_dynamics_forward.1} parent=1 // pred_check
      _
    $region43: #{ensemble_dynamics_forward.1} parent=1 // pred_check_branch
      %1240 = sbr.rel (0) target = $region45
    $region44: #{ensemble_dynamics_forward.1} parent=1 // pred_region
      _
    $region45: #{ensemble_dynamics_forward.1} parent=1 // pred_fallthru
      _
    // Predicated region
    $region46: #{ensemble_dynamics_forward.1} parent=1 // pred_check
      _
    $region47: #{ensemble_dynamics_forward.1} parent=1 // pred_check_branch
      %1242 = sbr.rel (0) target = $region49
    $region48: #{ensemble_dynamics_forward.1} parent=1 // pred_region
      _
    $region49: #{ensemble_dynamics_forward.1} parent=1 // pred_fallthru
      _
    // Predicated region
    $region50: #{ensemble_dynamics_forward.1} parent=1 // pred_check
      _
    $region51: #{ensemble_dynamics_forward.1} parent=1 // pred_check_branch
      %1244 = sbr.rel (0) target = $region53
    $region52: #{ensemble_dynamics_forward.1} parent=1 // pred_region
      %s1246 = ssub.s32 128, 128
      %1247 = vsyncadd [#allocation4], %s1246
      %s1249 = sshll.u32 [#allocation7], 4
      %s1250 = int_to_ptr.vmem [resolvable:$true] %s1249
      %1252 = dma.vmem_to_hbm [thread:$0]  %s1250, 128, %s10, [#allocation4]
    $region53: #{ensemble_dynamics_forward.1} parent=1 // pred_fallthru
      _
    // Predicated region
    $region54: #{ensemble_dynamics_forward.1} parent=1 // pred_check
      _
    $region55: #{ensemble_dynamics_forward.1} parent=1 // pred_check_branch
      %1254 = sbr.rel (0) target = $region57
    $region56: #{ensemble_dynamics_forward.1} parent=1 // pred_region
      _
    $region57: #{ensemble_dynamics_forward.1} parent=1 // pred_fallthru
      _
    // Predicated region
    $region58: #{ensemble_dynamics_forward.1} parent=1 // pred_check
      _
    $region59: #{ensemble_dynamics_forward.1} parent=1 // pred_check_branch
      %1256 = sbr.rel (0) target = $region61
    $region60: #{ensemble_dynamics_forward.1} parent=1 // pred_region
      _
    $region61: #{ensemble_dynamics_forward.1} parent=1 // pred_fallthru
      _
    // Predicated region
    $region62: #{ensemble_dynamics_forward.1} parent=1 // pred_check
      _
    $region63: #{ensemble_dynamics_forward.1} parent=1 // pred_check_branch
      %1258 = sbr.rel (0) target = $region65
    $region64: #{ensemble_dynamics_forward.1} parent=1 // pred_region
      %1259 = dma.done [#allocation4], 128
    $region65: #{ensemble_dynamics_forward.1} parent=1 // pred_fallthru
      _
    %1260 = vsyncpa [#allocation3], 1
    %1261 = vsyncpa [#allocation6], 1
    %1262 = vsyncpa [#allocation4], 1

</llo_original>
